<compile_context>
chip_gen: v7x
topology: tpu7x:2x2x1
jax: 0.10.0
libtpu: 0.0.40
codegen_flags: <defaults>
</compile_context>

<pallas_src>
import functools
import math

import jax
import jax.numpy as jnp
from jax.experimental import pallas as pl
from jax.experimental.pallas import tpu as pltpu

DTYPE = jnp.bfloat16

# small synthetic config (lane-dense: D and FFN are multiples of 128)
VOCAB = 64
B, S = 2, 8
D = 128
H = 2
DH = D // H
FFN = 256


# ----------------------------------------------------------------------------
# Fully-fused encoder layer + avg pooling (one grid step per batch element)
# ----------------------------------------------------------------------------
def _layernorm_f32(x, g, b, eps=1e-12):
    mu = jnp.mean(x, axis=-1, keepdims=True)
    var = jnp.mean((x - mu) ** 2, axis=-1, keepdims=True)
    inv = jax.lax.rsqrt(var + eps)
    return (x - mu) * inv * g + b


def _encoder_layer_kernel(
    x_ref, mask_ref,
    wqkv_ref, bqkv_ref, wo_ref, bo_ref,
    w1_ref, b1_ref, w2_ref, b2_ref,
    ln1_g_ref, ln1_b_ref, ln2_g_ref, ln2_b_ref,
    last_hidden_ref, pooled_ref,
    *, num_heads,
):
    x = x_ref[0]                                   # (S, D) bf16
    seq, dm = x.shape
    dh = dm // num_heads

    m = mask_ref[0]                                # (1, S) f32
    bias = (1.0 - m) * (-1e9)                      # additive key mask, f32

    # ---- fused QKV projection: bf16 x bf16 -> f32 on the MXU ----
    qkv = jnp.dot(x, wqkv_ref[...], preferred_element_type=jnp.float32)
    qkv = qkv + bqkv_ref[...].astype(jnp.float32)  # (S, 3D) f32
    qkv_bf = qkv.astype(jnp.bfloat16)

    # ---- attention: all heads processed inside this single kernel ----
    scale = 1.0 / math.sqrt(dh)
    ctx_heads = []
    for h in range(num_heads):                     # static unroll (H is small)
        q_h = qkv_bf[:, h * dh:(h + 1) * dh]                       # (S, dh)
        k_h = qkv_bf[:, dm + h * dh: dm + (h + 1) * dh]            # (S, dh)
        v_h = qkv_bf[:, 2 * dm + h * dh: 2 * dm + (h + 1) * dh]    # (S, dh)

        s = jnp.dot(q_h, k_h.T, preferred_element_type=jnp.float32) * scale
        s = s + bias                                               # (S, S) f32
        s_max = jnp.max(s, axis=-1, keepdims=True)
        p = jnp.exp(s - s_max)
        p_sum = jnp.sum(p, axis=-1, keepdims=True)
        p = p * pl.reciprocal(p_sum, approx=True)                  # EUP divide
        ctx_heads.append(
            jnp.dot(p.astype(jnp.bfloat16), v_h,
                    preferred_element_type=jnp.float32))           # (S, dh) f32
    ctx = jnp.concatenate(ctx_heads, axis=-1).astype(jnp.bfloat16)  # (S, D)

    # ---- output projection + residual + LN1 (fused, VMEM-resident) ----
    attn_out = jnp.dot(ctx, wo_ref[...], preferred_element_type=jnp.float32)
    attn_out = attn_out + bo_ref[...].astype(jnp.float32)
    h1 = _layernorm_f32(x.astype(jnp.float32) + attn_out,
                        ln1_g_ref[...].astype(jnp.float32),
                        ln1_b_ref[...].astype(jnp.float32))
    h1_bf = h1.astype(jnp.bfloat16)

    # ---- FFN (fused GELU) + residual + LN2 ----
    # TODO(synk): HuggingFace BERT uses exact erf-GELU; tanh approximation is
    # used here because it has a guaranteed Mosaic/EUP lowering.
    f = jnp.dot(h1_bf, w1_ref[...], preferred_element_type=jnp.float32)
    f = jax.nn.gelu(f + b1_ref[...].astype(jnp.float32), approximate=True)
    f = jnp.dot(f.astype(jnp.bfloat16), w2_ref[...],
                preferred_element_type=jnp.float32)
    f = f + b2_ref[...].astype(jnp.float32)
    h2 = _layernorm_f32(h1 + f,
                        ln2_g_ref[...].astype(jnp.float32),
                        ln2_b_ref[...].astype(jnp.float32))
    h2_bf = h2.astype(jnp.bfloat16)
    last_hidden_ref[0] = h2_bf

    # ---- Pooler('avg') on the VMEM-resident last_hidden ----
    # (last_hidden * mask).sum(1) / mask.sum(-1), done as a (1,S)x(S,D) matmul.
    msum = jnp.dot(m.astype(jnp.bfloat16), h2_bf,
                   preferred_element_type=jnp.float32)             # (1, D)
    count = jnp.sum(m, axis=-1, keepdims=True)                     # (1, 1)
    pooled_ref[0] = (msum / count).astype(pooled_ref.dtype)


def encoder_layer(x_emb, attention_mask, params):
    Bx, Sx, Dx = x_emb.shape
    mask3 = attention_mask.reshape(Bx, 1, Sx).astype(jnp.float32)

    kernel = functools.partial(_encoder_layer_kernel, num_heads=H)
    last_hidden, pooled = pl.pallas_call(
        kernel,
        out_shape=(
            jax.ShapeDtypeStruct((Bx, Sx, Dx), x_emb.dtype),
            jax.ShapeDtypeStruct((Bx, 1, Dx), x_emb.dtype),
        ),
        grid=(Bx,),
        in_specs=[
            pl.BlockSpec((1, Sx, Dx), lambda b: (b, 0, 0)),   # embedded tokens
            pl.BlockSpec((1, 1, Sx), lambda b: (b, 0, 0)),    # attention mask
            pl.BlockSpec((Dx, 3 * Dx), lambda b: (0, 0)),     # wqkv
            pl.BlockSpec((1, 3 * Dx), lambda b: (0, 0)),      # bqkv
            pl.BlockSpec((Dx, Dx), lambda b: (0, 0)),         # wo
            pl.BlockSpec((1, Dx), lambda b: (0, 0)),          # bo
            pl.BlockSpec((Dx, FFN), lambda b: (0, 0)),        # w1
            pl.BlockSpec((1, FFN), lambda b: (0, 0)),         # b1
            pl.BlockSpec((FFN, Dx), lambda b: (0, 0)),        # w2
            pl.BlockSpec((1, Dx), lambda b: (0, 0)),          # b2
            pl.BlockSpec((1, Dx), lambda b: (0, 0)),          # ln1_g
            pl.BlockSpec((1, Dx), lambda b: (0, 0)),          # ln1_b
            pl.BlockSpec((1, Dx), lambda b: (0, 0)),          # ln2_g
            pl.BlockSpec((1, Dx), lambda b: (0, 0)),          # ln2_b
        ],
        out_specs=(
            pl.BlockSpec((1, Sx, Dx), lambda b: (b, 0, 0)),
            pl.BlockSpec((1, 1, Dx), lambda b: (b, 0, 0)),
        ),
        compiler_params=pltpu.CompilerParams(
            dimension_semantics=("parallel",),     # megacore: split batch
        ),
    )(
        x_emb, mask3,
        params["wqkv"], params["bqkv"].reshape(1, 3 * Dx),
        params["wo"], params["bo"].reshape(1, Dx),
        params["w1"], params["b1"].reshape(1, FFN),
        params["w2"], params["b2"].reshape(1, Dx),
        params["ln1_g"].reshape(1, Dx), params["ln1_b"].reshape(1, Dx),
        params["ln2_g"].reshape(1, Dx), params["ln2_b"].reshape(1, Dx),
    )
    return last_hidden, pooled.reshape(Bx, Dx)


# ----------------------------------------------------------------------------
# Synthetic backbone params + Encoder.forward semantics
# ----------------------------------------------------------------------------
def init_params(key):
    ks = jax.random.split(key, 6)
    s = 0.02

    def w(k, shape):
        return (jax.random.normal(k, shape, jnp.float32) * s).astype(DTYPE)

    return {
        "emb": w(ks[0], (VOCAB, D)),
        "wqkv": w(ks[1], (D, 3 * D)), "bqkv": jnp.zeros((3 * D,), DTYPE),
        "wo": w(ks[2], (D, D)), "bo": jnp.zeros((D,), DTYPE),
        "w1": w(ks[3], (D, FFN)), "b1": jnp.zeros((FFN,), DTYPE),
        "w2": w(ks[4], (FFN, D)), "b2": jnp.zeros((D,), DTYPE),
        "ln1_g": jnp.ones((D,), DTYPE), "ln1_b": jnp.zeros((D,), DTYPE),
        "ln2_g": jnp.ones((D,), DTYPE), "ln2_b": jnp.zeros((D,), DTYPE),
    }


@functools.partial(jax.jit, static_argnames=("mode",))
def encoder_forward(params, input_ids, attention_mask, token_type_ids=None, mode=None):
    # embedding lookup (glue outside the kernel); token_type_ids ignored by the
    # synthetic backbone.
    x = jnp.take(params["emb"], input_ids, axis=0)            # (B, S, D) bf16
    last_hidden, pooled = encoder_layer(x, attention_mask, params)

    if mode == "query":
        return pooled                                          # Pooler('avg')
    return last_hidden                                         # last_hidden_state
    # TODO(synk): 'cls' / 'avg_first_last' / 'avg_top2' pooler variants need the
    # backbone's pooler_output / per-layer hidden_states tuple, which a synthetic
    # single-layer backbone does not expose; only 'avg' is implemented.


if __name__ == "__main__":
    key = jax.random.PRNGKey(0)
    pkey, ikey = jax.random.split(key)
    params = init_params(pkey)

    input_ids = jax.random.randint(ikey, (B, S), 0, VOCAB, dtype=jnp.int32)
    # mask out the last two tokens of the second sequence
    attention_mask = jnp.array(
        [[1] * S, [1] * (S - 2) + [0] * 2], dtype=jnp.float32
    )

    pooled = encoder_forward(params, input_ids, attention_mask, mode="query")
    last_hidden = encoder_forward(params, input_ids, attention_mask, mode=None)

    jax.block_until_ready(pooled)
    jax.block_until_ready(last_hidden)

    assert pooled.shape == (B, D) and pooled.dtype == DTYPE
    assert last_hidden.shape == (B, S, D) and last_hidden.dtype == DTYPE
    assert bool(jnp.all(jnp.isfinite(pooled.astype(jnp.float32))))
    print("KERNEL_OK")
</pallas_src>

<mosaic_0001>
module attributes {stable_mosaic.version = 11 : i64} {
  func.func @_encoder_layer_kernel(%arg0: i32, %arg1: memref<1x8x128xbf16, #tpu.memory_space<vmem>>, %arg2: memref<1x1x8xf32, #tpu.memory_space<vmem>>, %arg3: memref<128x384xbf16, #tpu.memory_space<vmem>>, %arg4: memref<1x384xbf16, #tpu.memory_space<vmem>>, %arg5: memref<128x128xbf16, #tpu.memory_space<vmem>>, %arg6: memref<1x128xbf16, #tpu.memory_space<vmem>>, %arg7: memref<128x256xbf16, #tpu.memory_space<vmem>>, %arg8: memref<1x256xbf16, #tpu.memory_space<vmem>>, %arg9: memref<256x128xbf16, #tpu.memory_space<vmem>>, %arg10: memref<1x128xbf16, #tpu.memory_space<vmem>>, %arg11: memref<1x128xbf16, #tpu.memory_space<vmem>>, %arg12: memref<1x128xbf16, #tpu.memory_space<vmem>>, %arg13: memref<1x128xbf16, #tpu.memory_space<vmem>>, %arg14: memref<1x128xbf16, #tpu.memory_space<vmem>>, %arg15: memref<1x8x128xbf16, #tpu.memory_space<vmem>>, %arg16: memref<1x1x128xbf16, #tpu.memory_space<vmem>>) attributes {dimension_semantics = [#tpu.dimension_semantics<parallel>], iteration_bounds = array<i64: 2>, scalar_prefetch = 0 : i64, scratch_operands = 0 : i64, tpu.core_type = #tpu.core_type<tc>, window_params = [{transform_indices = @transform_0, window_bounds = array<i64: 1, 8, 128>}, {transform_indices = @transform_1, window_bounds = array<i64: 1, 1, 8>}, {pipeline_mode = #tpu.pipeline_mode<synchronous>, transform_indices = @transform_2, window_bounds = array<i64: 128, 384>}, {pipeline_mode = #tpu.pipeline_mode<synchronous>, transform_indices = @transform_3, window_bounds = array<i64: 1, 384>}, {pipeline_mode = #tpu.pipeline_mode<synchronous>, transform_indices = @transform_4, window_bounds = array<i64: 128, 128>}, {pipeline_mode = #tpu.pipeline_mode<synchronous>, transform_indices = @transform_5, window_bounds = array<i64: 1, 128>}, {pipeline_mode = #tpu.pipeline_mode<synchronous>, transform_indices = @transform_6, window_bounds = array<i64: 128, 256>}, {pipeline_mode = #tpu.pipeline_mode<synchronous>, transform_indices = @transform_7, window_bounds = array<i64: 1, 256>}, {pipeline_mode = #tpu.pipeline_mode<synchronous>, transform_indices = @transform_8, window_bounds = array<i64: 256, 128>}, {pipeline_mode = #tpu.pipeline_mode<synchronous>, transform_indices = @transform_9, window_bounds = array<i64: 1, 128>}, {pipeline_mode = #tpu.pipeline_mode<synchronous>, transform_indices = @transform_10, window_bounds = array<i64: 1, 128>}, {pipeline_mode = #tpu.pipeline_mode<synchronous>, transform_indices = @transform_11, window_bounds = array<i64: 1, 128>}, {pipeline_mode = #tpu.pipeline_mode<synchronous>, transform_indices = @transform_12, window_bounds = array<i64: 1, 128>}, {pipeline_mode = #tpu.pipeline_mode<synchronous>, transform_indices = @transform_13, window_bounds = array<i64: 1, 128>}, {transform_indices = @transform_14, window_bounds = array<i64: 1, 8, 128>}, {transform_indices = @transform_15, window_bounds = array<i64: 1, 1, 128>}]} {
    %c0 = arith.constant 0 : index
    %c0_0 = arith.constant 0 : index
    %c0_1 = arith.constant 0 : index
    %0 = vector.load %arg1[%c0, %c0_0, %c0_1] : memref<1x8x128xbf16, #tpu.memory_space<vmem>>, vector<1x8x128xbf16>
    %1 = vector.shape_cast %0 : vector<1x8x128xbf16> to vector<8x128xbf16>
    %c0_2 = arith.constant 0 : index
    %c0_3 = arith.constant 0 : index
    %c0_4 = arith.constant 0 : index
    %2 = vector.load %arg2[%c0_2, %c0_3, %c0_4] : memref<1x1x8xf32, #tpu.memory_space<vmem>>, vector<1x1x8xf32>
    %3 = vector.shape_cast %2 : vector<1x1x8xf32> to vector<1x8xf32>
    %cst = arith.constant 1.000000e+00 : f32
    %4 = vector.broadcast %cst : f32 to vector<1x8xf32>
    %5 = arith.subf %4, %3 : vector<1x8xf32>
    %cst_5 = arith.constant -1.000000e+09 : f32
    %6 = vector.broadcast %cst_5 : f32 to vector<1x8xf32>
    %7 = arith.mulf %5, %6 : vector<1x8xf32>
    %c0_6 = arith.constant 0 : index
    %c0_7 = arith.constant 0 : index
    %8 = vector.load %arg3[%c0_6, %c0_7] : memref<128x384xbf16, #tpu.memory_space<vmem>>, vector<128x384xbf16>
    %cst_8 = arith.constant dense<0.000000e+00> : vector<8x384xf32>
    %9 = tpu.matmul %1, %8, %cst_8 {dimension_numbers = #tpu.dot_dimension_numbers<[1], [0], [0], [1], [0, 0, 1, 1], [], []>} : vector<8x128xbf16>, vector<128x384xbf16>, vector<8x384xf32> -> vector<8x384xf32>
    %c0_9 = arith.constant 0 : index
    %c0_10 = arith.constant 0 : index
    %10 = vector.load %arg4[%c0_9, %c0_10] : memref<1x384xbf16, #tpu.memory_space<vmem>>, vector<1x384xbf16>
    %11 = arith.extf %10 : vector<1x384xbf16> to vector<1x384xf32>
    %12 = vector.broadcast %11 : vector<1x384xf32> to vector<8x384xf32>
    %13 = arith.addf %9, %12 : vector<8x384xf32>
    %14 = arith.truncf %13 : vector<8x384xf32> to vector<8x384xbf16>
    %15 = vector.extract_strided_slice %14 {offsets = [0, 0], sizes = [8, 64], strides = [1, 1]} : vector<8x384xbf16> to vector<8x64xbf16>
    %16 = vector.extract_strided_slice %14 {offsets = [0, 128], sizes = [8, 64], strides = [1, 1]} : vector<8x384xbf16> to vector<8x64xbf16>
    %17 = vector.extract_strided_slice %14 {offsets = [0, 256], sizes = [8, 64], strides = [1, 1]} : vector<8x384xbf16> to vector<8x64xbf16>
    %18 = tpu.transpose %16, [1, 0] : vector<8x64xbf16> -> vector<64x8xbf16>
    %cst_11 = arith.constant dense<0.000000e+00> : vector<8x8xf32>
    %19 = tpu.matmul %15, %18, %cst_11 {dimension_numbers = #tpu.dot_dimension_numbers<[1], [0], [0], [1], [0, 0, 1, 1], [], []>} : vector<8x64xbf16>, vector<64x8xbf16>, vector<8x8xf32> -> vector<8x8xf32>
    %cst_12 = arith.constant 1.250000e-01 : f32
    %20 = vector.broadcast %cst_12 : f32 to vector<8x8xf32>
    %21 = arith.mulf %19, %20 : vector<8x8xf32>
    %22 = vector.broadcast %7 : vector<1x8xf32> to vector<8x8xf32>
    %23 = arith.addf %21, %22 : vector<8x8xf32>
    %cst_13 = arith.constant dense<0xFF800000> : vector<8xf32>
    %24 = vector.multi_reduction <maximumf>, %23, %cst_13 [1] : vector<8x8xf32> to vector<8xf32>
    %25 = vector.shape_cast %24 : vector<8xf32> to vector<8x1xf32>
    %26 = vector.broadcast %25 : vector<8x1xf32> to vector<8x8xf32>
    %27 = arith.subf %23, %26 : vector<8x8xf32>
    %28 = math.exp %27 : vector<8x8xf32>
    %cst_14 = arith.constant dense<0.000000e+00> : vector<8xf32>
    %29 = vector.multi_reduction <add>, %28, %cst_14 [1] : vector<8x8xf32> to vector<8xf32>
    %30 = vector.shape_cast %29 : vector<8xf32> to vector<8x1xf32>
    %31 = tpu.reciprocal %30 {approx = true} : vector<8x1xf32> -> vector<8x1xf32>
    %32 = vector.broadcast %31 : vector<8x1xf32> to vector<8x8xf32>
    %33 = arith.mulf %28, %32 : vector<8x8xf32>
    %34 = arith.truncf %33 : vector<8x8xf32> to vector<8x8xbf16>
    %cst_15 = arith.constant dense<0.000000e+00> : vector<8x64xf32>
    %35 = tpu.matmul %34, %17, %cst_15 {dimension_numbers = #tpu.dot_dimension_numbers<[1], [0], [0], [1], [0, 0, 1, 1], [], []>} : vector<8x8xbf16>, vector<8x64xbf16>, vector<8x64xf32> -> vector<8x64xf32>
    %36 = vector.extract_strided_slice %14 {offsets = [0, 64], sizes = [8, 64], strides = [1, 1]} : vector<8x384xbf16> to vector<8x64xbf16>
    %37 = vector.extract_strided_slice %14 {offsets = [0, 192], sizes = [8, 64], strides = [1, 1]} : vector<8x384xbf16> to vector<8x64xbf16>
    %38 = vector.extract_strided_slice %14 {offsets = [0, 320], sizes = [8, 64], strides = [1, 1]} : vector<8x384xbf16> to vector<8x64xbf16>
    %39 = tpu.transpose %37, [1, 0] : vector<8x64xbf16> -> vector<64x8xbf16>
    %cst_16 = arith.constant dense<0.000000e+00> : vector<8x8xf32>
    %40 = tpu.matmul %36, %39, %cst_16 {dimension_numbers = #tpu.dot_dimension_numbers<[1], [0], [0], [1], [0, 0, 1, 1], [], []>} : vector<8x64xbf16>, vector<64x8xbf16>, vector<8x8xf32> -> vector<8x8xf32>
    %cst_17 = arith.constant 1.250000e-01 : f32
    %41 = vector.broadcast %cst_17 : f32 to vector<8x8xf32>
    %42 = arith.mulf %40, %41 : vector<8x8xf32>
    %43 = vector.broadcast %7 : vector<1x8xf32> to vector<8x8xf32>
    %44 = arith.addf %42, %43 : vector<8x8xf32>
    %cst_18 = arith.constant dense<0xFF800000> : vector<8xf32>
    %45 = vector.multi_reduction <maximumf>, %44, %cst_18 [1] : vector<8x8xf32> to vector<8xf32>
    %46 = vector.shape_cast %45 : vector<8xf32> to vector<8x1xf32>
    %47 = vector.broadcast %46 : vector<8x1xf32> to vector<8x8xf32>
    %48 = arith.subf %44, %47 : vector<8x8xf32>
    %49 = math.exp %48 : vector<8x8xf32>
    %cst_19 = arith.constant dense<0.000000e+00> : vector<8xf32>
    %50 = vector.multi_reduction <add>, %49, %cst_19 [1] : vector<8x8xf32> to vector<8xf32>
    %51 = vector.shape_cast %50 : vector<8xf32> to vector<8x1xf32>
    %52 = tpu.reciprocal %51 {approx = true} : vector<8x1xf32> -> vector<8x1xf32>
    %53 = vector.broadcast %52 : vector<8x1xf32> to vector<8x8xf32>
    %54 = arith.mulf %49, %53 : vector<8x8xf32>
    %55 = arith.truncf %54 : vector<8x8xf32> to vector<8x8xbf16>
    %cst_20 = arith.constant dense<0.000000e+00> : vector<8x64xf32>
    %56 = tpu.matmul %55, %38, %cst_20 {dimension_numbers = #tpu.dot_dimension_numbers<[1], [0], [0], [1], [0, 0, 1, 1], [], []>} : vector<8x8xbf16>, vector<8x64xbf16>, vector<8x64xf32> -> vector<8x64xf32>
    %57 = tpu.concatenate %35, %56 in 1 : vector<8x64xf32>, vector<8x64xf32> -> vector<8x128xf32>
    %58 = arith.truncf %57 : vector<8x128xf32> to vector<8x128xbf16>
    %c0_21 = arith.constant 0 : index
    %c0_22 = arith.constant 0 : index
    %59 = vector.load %arg5[%c0_21, %c0_22] : memref<128x128xbf16, #tpu.memory_space<vmem>>, vector<128x128xbf16>
    %cst_23 = arith.constant dense<0.000000e+00> : vector<8x128xf32>
    %60 = tpu.matmul %58, %59, %cst_23 {dimension_numbers = #tpu.dot_dimension_numbers<[1], [0], [0], [1], [0, 0, 1, 1], [], []>} : vector<8x128xbf16>, vector<128x128xbf16>, vector<8x128xf32> -> vector<8x128xf32>
    %c0_24 = arith.constant 0 : index
    %c0_25 = arith.constant 0 : index
    %61 = vector.load %arg6[%c0_24, %c0_25] : memref<1x128xbf16, #tpu.memory_space<vmem>>, vector<1x128xbf16>
    %62 = arith.extf %61 : vector<1x128xbf16> to vector<1x128xf32>
    %63 = vector.broadcast %62 : vector<1x128xf32> to vector<8x128xf32>
    %64 = arith.addf %60, %63 : vector<8x128xf32>
    %65 = arith.extf %1 : vector<8x128xbf16> to vector<8x128xf32>
    %66 = arith.addf %65, %64 : vector<8x128xf32>
    %c0_26 = arith.constant 0 : index
    %c0_27 = arith.constant 0 : index
    %67 = vector.load %arg11[%c0_26, %c0_27] : memref<1x128xbf16, #tpu.memory_space<vmem>>, vector<1x128xbf16>
    %68 = arith.extf %67 : vector<1x128xbf16> to vector<1x128xf32>
    %c0_28 = arith.constant 0 : index
    %c0_29 = arith.constant 0 : index
    %69 = vector.load %arg12[%c0_28, %c0_29] : memref<1x128xbf16, #tpu.memory_space<vmem>>, vector<1x128xbf16>
    %70 = arith.extf %69 : vector<1x128xbf16> to vector<1x128xf32>
    %cst_30 = arith.constant dense<0.000000e+00> : vector<8xf32>
    %71 = vector.multi_reduction <add>, %66, %cst_30 [1] : vector<8x128xf32> to vector<8xf32>
    %72 = vector.shape_cast %71 : vector<8xf32> to vector<8x1xf32>
    %cst_31 = arith.constant 1.280000e+02 : f32
    %73 = vector.broadcast %cst_31 : f32 to vector<8x1xf32>
    %74 = arith.divf %72, %73 : vector<8x1xf32>
    %75 = vector.broadcast %74 : vector<8x1xf32> to vector<8x128xf32>
    %76 = arith.subf %66, %75 : vector<8x128xf32>
    %77 = arith.mulf %76, %76 : vector<8x128xf32>
    %cst_32 = arith.constant dense<0.000000e+00> : vector<8xf32>
    %78 = vector.multi_reduction <add>, %77, %cst_32 [1] : vector<8x128xf32> to vector<8xf32>
    %79 = vector.shape_cast %78 : vector<8xf32> to vector<8x1xf32>
    %cst_33 = arith.constant 1.280000e+02 : f32
    %80 = vector.broadcast %cst_33 : f32 to vector<8x1xf32>
    %81 = arith.divf %79, %80 : vector<8x1xf32>
    %cst_34 = arith.constant 9.99999996E-13 : f32
    %82 = vector.broadcast %cst_34 : f32 to vector<8x1xf32>
    %83 = arith.addf %81, %82 : vector<8x1xf32>
    %84 = math.rsqrt %83 : vector<8x1xf32>
    %85 = vector.broadcast %74 : vector<8x1xf32> to vector<8x128xf32>
    %86 = arith.subf %66, %85 : vector<8x128xf32>
    %87 = vector.broadcast %84 : vector<8x1xf32> to vector<8x128xf32>
    %88 = arith.mulf %86, %87 : vector<8x128xf32>
    %89 = vector.broadcast %68 : vector<1x128xf32> to vector<8x128xf32>
    %90 = arith.mulf %88, %89 : vector<8x128xf32>
    %91 = vector.broadcast %70 : vector<1x128xf32> to vector<8x128xf32>
    %92 = arith.addf %90, %91 : vector<8x128xf32>
    %93 = arith.truncf %92 : vector<8x128xf32> to vector<8x128xbf16>
    %c0_35 = arith.constant 0 : index
    %c0_36 = arith.constant 0 : index
    %94 = vector.load %arg7[%c0_35, %c0_36] : memref<128x256xbf16, #tpu.memory_space<vmem>>, vector<128x256xbf16>
    %cst_37 = arith.constant dense<0.000000e+00> : vector<8x256xf32>
    %95 = tpu.matmul %93, %94, %cst_37 {dimension_numbers = #tpu.dot_dimension_numbers<[1], [0], [0], [1], [0, 0, 1, 1], [], []>} : vector<8x128xbf16>, vector<128x256xbf16>, vector<8x256xf32> -> vector<8x256xf32>
    %c0_38 = arith.constant 0 : index
    %c0_39 = arith.constant 0 : index
    %96 = vector.load %arg8[%c0_38, %c0_39] : memref<1x256xbf16, #tpu.memory_space<vmem>>, vector<1x256xbf16>
    %97 = arith.extf %96 : vector<1x256xbf16> to vector<1x256xf32>
    %98 = vector.broadcast %97 : vector<1x256xf32> to vector<8x256xf32>
    %99 = arith.addf %95, %98 : vector<8x256xf32>
    %100 = arith.mulf %99, %99 : vector<8x256xf32>
    %101 = arith.mulf %99, %100 : vector<8x256xf32>
    %cst_40 = arith.constant 4.471500e-02 : f32
    %102 = vector.broadcast %cst_40 : f32 to vector<8x256xf32>
    %103 = arith.mulf %102, %101 : vector<8x256xf32>
    %104 = arith.addf %99, %103 : vector<8x256xf32>
    %cst_41 = arith.constant 0.797884583 : f32
    %105 = vector.broadcast %cst_41 : f32 to vector<8x256xf32>
    %106 = arith.mulf %105, %104 : vector<8x256xf32>
    %107 = math.tanh %106 : vector<8x256xf32>
    %cst_42 = arith.constant 1.000000e+00 : f32
    %108 = vector.broadcast %cst_42 : f32 to vector<8x256xf32>
    %109 = arith.addf %108, %107 : vector<8x256xf32>
    %cst_43 = arith.constant 5.000000e-01 : f32
    %110 = vector.broadcast %cst_43 : f32 to vector<8x256xf32>
    %111 = arith.mulf %110, %109 : vector<8x256xf32>
    %112 = arith.mulf %99, %111 : vector<8x256xf32>
    %113 = arith.truncf %112 : vector<8x256xf32> to vector<8x256xbf16>
    %c0_44 = arith.constant 0 : index
    %c0_45 = arith.constant 0 : index
    %114 = vector.load %arg9[%c0_44, %c0_45] : memref<256x128xbf16, #tpu.memory_space<vmem>>, vector<256x128xbf16>
    %cst_46 = arith.constant dense<0.000000e+00> : vector<8x128xf32>
    %115 = tpu.matmul %113, %114, %cst_46 {dimension_numbers = #tpu.dot_dimension_numbers<[1], [0], [0], [1], [0, 0, 1, 1], [], []>} : vector<8x256xbf16>, vector<256x128xbf16>, vector<8x128xf32> -> vector<8x128xf32>
    %c0_47 = arith.constant 0 : index
    %c0_48 = arith.constant 0 : index
    %116 = vector.load %arg10[%c0_47, %c0_48] : memref<1x128xbf16, #tpu.memory_space<vmem>>, vector<1x128xbf16>
    %117 = arith.extf %116 : vector<1x128xbf16> to vector<1x128xf32>
    %118 = vector.broadcast %117 : vector<1x128xf32> to vector<8x128xf32>
    %119 = arith.addf %115, %118 : vector<8x128xf32>
    %120 = arith.addf %92, %119 : vector<8x128xf32>
    %c0_49 = arith.constant 0 : index
    %c0_50 = arith.constant 0 : index
    %121 = vector.load %arg13[%c0_49, %c0_50] : memref<1x128xbf16, #tpu.memory_space<vmem>>, vector<1x128xbf16>
    %122 = arith.extf %121 : vector<1x128xbf16> to vector<1x128xf32>
    %c0_51 = arith.constant 0 : index
    %c0_52 = arith.constant 0 : index
    %123 = vector.load %arg14[%c0_51, %c0_52] : memref<1x128xbf16, #tpu.memory_space<vmem>>, vector<1x128xbf16>
    %124 = arith.extf %123 : vector<1x128xbf16> to vector<1x128xf32>
    %cst_53 = arith.constant dense<0.000000e+00> : vector<8xf32>
    %125 = vector.multi_reduction <add>, %120, %cst_53 [1] : vector<8x128xf32> to vector<8xf32>
    %126 = vector.shape_cast %125 : vector<8xf32> to vector<8x1xf32>
    %cst_54 = arith.constant 1.280000e+02 : f32
    %127 = vector.broadcast %cst_54 : f32 to vector<8x1xf32>
    %128 = arith.divf %126, %127 : vector<8x1xf32>
    %129 = vector.broadcast %128 : vector<8x1xf32> to vector<8x128xf32>
    %130 = arith.subf %120, %129 : vector<8x128xf32>
    %131 = arith.mulf %130, %130 : vector<8x128xf32>
    %cst_55 = arith.constant dense<0.000000e+00> : vector<8xf32>
    %132 = vector.multi_reduction <add>, %131, %cst_55 [1] : vector<8x128xf32> to vector<8xf32>
    %133 = vector.shape_cast %132 : vector<8xf32> to vector<8x1xf32>
    %cst_56 = arith.constant 1.280000e+02 : f32
    %134 = vector.broadcast %cst_56 : f32 to vector<8x1xf32>
    %135 = arith.divf %133, %134 : vector<8x1xf32>
    %cst_57 = arith.constant 9.99999996E-13 : f32
    %136 = vector.broadcast %cst_57 : f32 to vector<8x1xf32>
    %137 = arith.addf %135, %136 : vector<8x1xf32>
    %138 = math.rsqrt %137 : vector<8x1xf32>
    %139 = vector.broadcast %128 : vector<8x1xf32> to vector<8x128xf32>
    %140 = arith.subf %120, %139 : vector<8x128xf32>
    %141 = vector.broadcast %138 : vector<8x1xf32> to vector<8x128xf32>
    %142 = arith.mulf %140, %141 : vector<8x128xf32>
    %143 = vector.broadcast %122 : vector<1x128xf32> to vector<8x128xf32>
    %144 = arith.mulf %142, %143 : vector<8x128xf32>
    %145 = vector.broadcast %124 : vector<1x128xf32> to vector<8x128xf32>
    %146 = arith.addf %144, %145 : vector<8x128xf32>
    %147 = arith.truncf %146 : vector<8x128xf32> to vector<8x128xbf16>
    %c0_58 = arith.constant 0 : index
    %c0_59 = arith.constant 0 : index
    %c0_60 = arith.constant 0 : index
    %148 = vector.load %arg15[%c0_58, %c0_59, %c0_60] : memref<1x8x128xbf16, #tpu.memory_space<vmem>>, vector<1x8x128xbf16>
    %149 = vector.shape_cast %148 : vector<1x8x128xbf16> to vector<8x128xbf16>
    %150 = vector.shape_cast %147 : vector<8x128xbf16> to vector<1x8x128xbf16>
    tpu.vector_store %arg15[%c0_58, %c0_59, %c0_60], %150 {strides = array<i32>} : memref<1x8x128xbf16, #tpu.memory_space<vmem>>, vector<1x8x128xbf16>,
    %151 = arith.truncf %3 : vector<1x8xf32> to vector<1x8xbf16>
    %cst_61 = arith.constant dense<0.000000e+00> : vector<1x128xf32>
    %152 = tpu.matmul %151, %147, %cst_61 {dimension_numbers = #tpu.dot_dimension_numbers<[1], [0], [0], [1], [0, 0, 1, 1], [], []>} : vector<1x8xbf16>, vector<8x128xbf16>, vector<1x128xf32> -> vector<1x128xf32>
    %cst_62 = arith.constant dense<0.000000e+00> : vector<1xf32>
    %153 = vector.multi_reduction <add>, %3, %cst_62 [1] : vector<1x8xf32> to vector<1xf32>
    %154 = vector.shape_cast %153 : vector<1xf32> to vector<1x1xf32>
    %155 = vector.broadcast %154 : vector<1x1xf32> to vector<1x128xf32>
    %156 = arith.divf %152, %155 : vector<1x128xf32>
    %157 = arith.truncf %156 : vector<1x128xf32> to vector<1x128xbf16>
    %c0_63 = arith.constant 0 : index
    %c0_64 = arith.constant 0 : index
    %c0_65 = arith.constant 0 : index
    %158 = vector.load %arg16[%c0_63, %c0_64, %c0_65] : memref<1x1x128xbf16, #tpu.memory_space<vmem>>, vector<1x1x128xbf16>
    %159 = vector.shape_cast %158 : vector<1x1x128xbf16> to vector<1x128xbf16>
    %160 = vector.shape_cast %157 : vector<1x128xbf16> to vector<1x1x128xbf16>
    tpu.vector_store %arg16[%c0_63, %c0_64, %c0_65], %160 {strides = array<i32>} : memref<1x1x128xbf16, #tpu.memory_space<vmem>>, vector<1x1x128xbf16>,
    return
  }
  func.func @transform_0(%arg0: i32) -> (i32, i32, i32) {
    %c0_i32 = arith.constant 0 : i32
    %c0_i32_0 = arith.constant 0 : i32
    %c0_i32_1 = arith.constant 0 : i32
    return %arg0, %c0_i32, %c0_i32_0 : i32, i32, i32
  }
  func.func @transform_1(%arg0: i32) -> (i32, i32, i32) {
    %c0_i32 = arith.constant 0 : i32
    %c0_i32_0 = arith.constant 0 : i32
    %c0_i32_1 = arith.constant 0 : i32
    return %arg0, %c0_i32, %c0_i32_0 : i32, i32, i32
  }
  func.func @transform_2(%arg0: i32) -> (i32, i32) {
    %c0_i32 = arith.constant 0 : i32
    %c0_i32_0 = arith.constant 0 : i32
    %c0_i32_1 = arith.constant 0 : i32
    return %c0_i32, %c0_i32_0 : i32, i32
  }
  func.func @transform_3(%arg0: i32) -> (i32, i32) {
    %c0_i32 = arith.constant 0 : i32
    %c0_i32_0 = arith.constant 0 : i32
    %c0_i32_1 = arith.constant 0 : i32
    return %c0_i32, %c0_i32_0 : i32, i32
  }
  func.func @transform_4(%arg0: i32) -> (i32, i32) {
    %c0_i32 = arith.constant 0 : i32
    %c0_i32_0 = arith.constant 0 : i32
    %c0_i32_1 = arith.constant 0 : i32
    return %c0_i32, %c0_i32_0 : i32, i32
  }
  func.func @transform_5(%arg0: i32) -> (i32, i32) {
    %c0_i32 = arith.constant 0 : i32
    %c0_i32_0 = arith.constant 0 : i32
    %c0_i32_1 = arith.constant 0 : i32
    return %c0_i32, %c0_i32_0 : i32, i32
  }
  func.func @transform_6(%arg0: i32) -> (i32, i32) {
    %c0_i32 = arith.constant 0 : i32
    %c0_i32_0 = arith.constant 0 : i32
    %c0_i32_1 = arith.constant 0 : i32
    return %c0_i32, %c0_i32_0 : i32, i32
  }
  func.func @transform_7(%arg0: i32) -> (i32, i32) {
    %c0_i32 = arith.constant 0 : i32
    %c0_i32_0 = arith.constant 0 : i32
    %c0_i32_1 = arith.constant 0 : i32
    return %c0_i32, %c0_i32_0 : i32, i32
  }
  func.func @transform_8(%arg0: i32) -> (i32, i32) {
    %c0_i32 = arith.constant 0 : i32
    %c0_i32_0 = arith.constant 0 : i32
    %c0_i32_1 = arith.constant 0 : i32
    return %c0_i32, %c0_i32_0 : i32, i32
  }
  func.func @transform_9(%arg0: i32) -> (i32, i32) {
    %c0_i32 = arith.constant 0 : i32
    %c0_i32_0 = arith.constant 0 : i32
    %c0_i32_1 = arith.constant 0 : i32
    return %c0_i32, %c0_i32_0 : i32, i32
  }
  func.func @transform_10(%arg0: i32) -> (i32, i32) {
    %c0_i32 = arith.constant 0 : i32
    %c0_i32_0 = arith.constant 0 : i32
    %c0_i32_1 = arith.constant 0 : i32
    return %c0_i32, %c0_i32_0 : i32, i32
  }
  func.func @transform_11(%arg0: i32) -> (i32, i32) {
    %c0_i32 = arith.constant 0 : i32
    %c0_i32_0 = arith.constant 0 : i32
    %c0_i32_1 = arith.constant 0 : i32
    return %c0_i32, %c0_i32_0 : i32, i32
  }
  func.func @transform_12(%arg0: i32) -> (i32, i32) {
    %c0_i32 = arith.constant 0 : i32
    %c0_i32_0 = arith.constant 0 : i32
    %c0_i32_1 = arith.constant 0 : i32
    return %c0_i32, %c0_i32_0 : i32, i32
  }
  func.func @transform_13(%arg0: i32) -> (i32, i32) {
    %c0_i32 = arith.constant 0 : i32
    %c0_i32_0 = arith.constant 0 : i32
    %c0_i32_1 = arith.constant 0 : i32
    return %c0_i32, %c0_i32_0 : i32, i32
  }
  func.func @transform_14(%arg0: i32) -> (i32, i32, i32) {
    %c0_i32 = arith.constant 0 : i32
    %c0_i32_0 = arith.constant 0 : i32
    %c0_i32_1 = arith.constant 0 : i32
    return %arg0, %c0_i32, %c0_i32_0 : i32, i32, i32
  }
  func.func @transform_15(%arg0: i32) -> (i32, i32, i32) {
    %c0_i32 = arith.constant 0 : i32
    %c0_i32_0 = arith.constant 0 : i32
    %c0_i32_1 = arith.constant 0 : i32
    return %arg0, %c0_i32, %c0_i32_0 : i32, i32, i32
  }
}

</mosaic_0001>

<llo_original>
// kernel: encoder_forward.1
$region0: #{encoder_forward.1}
  #allocation0 [shape = 'u32[]', space=smem, size = 0x4, offset = 0x4, fixed_abs, tag = 'smem constant byte address 0x4 - core index']
  #allocation1 [shape = 'u32[144,128]{1,0:T(1,128)}', space=vmem, size = 0x12000, scoped, tag = 'internal scratch']
  %s0 = inlined_call_operand.vmem [shape: bf16[2,8,128], index: 0, kind: input, shape index: {}]
  %s1 = inlined_call_operand.vmem [shape: f32[2,1,8], index: 1, kind: input, shape index: {}]
  %s2 = inlined_call_operand.vmem [shape: bf16[128,384], index: 2, kind: input, shape index: {}]
  %s3 = inlined_call_operand.vmem [shape: bf16[1,384], index: 3, kind: input, shape index: {}]
  %s4 = inlined_call_operand.hbm [shape: bf16[128,128], index: 4, kind: input, shape index: {}]
  %s5 = inlined_call_operand.hbm [shape: bf16[1,128], index: 5, kind: input, shape index: {}]
  %s6 = inlined_call_operand.hbm [shape: bf16[128,256], index: 6, kind: input, shape index: {}]
  %s7 = inlined_call_operand.vmem [shape: bf16[1,256], index: 7, kind: input, shape index: {}]
  %s8 = inlined_call_operand.hbm [shape: bf16[256,128], index: 8, kind: input, shape index: {}]
  %s9 = inlined_call_operand.hbm [shape: bf16[1,128], index: 9, kind: input, shape index: {}]
  %s10 = inlined_call_operand.hbm [shape: bf16[1,128], index: 10, kind: input, shape index: {}]
  %s11 = inlined_call_operand.hbm [shape: bf16[1,128], index: 11, kind: input, shape index: {}]
  %s12 = inlined_call_operand.hbm [shape: bf16[1,128], index: 12, kind: input, shape index: {}]
  %s13 = inlined_call_operand.hbm [shape: bf16[1,128], index: 13, kind: input, shape index: {}]
  %s14 = inlined_call_operand.hbm [shape: bf16[2,8,128], index: 14, kind: output, shape index: {0}]
  %s15 = inlined_call_operand.vmem [shape: bf16[2,1,128], index: 15, kind: output, shape index: {1}]
  %16 = xla_tuple %s14, %s15
  %s17 = sld [smem:[#allocation0]]
  $region133: #{encoder_forward.1} parent=0
    _
  %s19 = ssub.s32 1, %s17
  %s20 = scalar_select 0, %s19, %s17
  $region1: #{encoder_forward.1} parent=0
    #allocation2 [shape = 'u8[32768]{0}', space=vmem, size = 0x8000, scoped, tag = 'input window, operand 4, single buffered']
    #allocation3 [shape = 's32[2]{0}', space=sflag, size = 0x8, scoped, tag = 'scoped memory for encoder_forward.1']
    #allocation4 [shape = 's32[2]{0}', space=sflag, size = 0x8, scoped, tag = 'scoped memory for encoder_forward.1']
    #allocation5 [shape = 'u8[512]{0}', space=vmem, size = 0x400, scoped, tag = 'input window, operand 5, single buffered']
    #allocation6 [shape = 's32[1]{0}', space=sflag, size = 0x4, scoped, tag = 'scoped memory for encoder_forward.1']
    #allocation7 [shape = 'u8[65536]{0}', space=vmem, size = 0x10000, scoped, tag = 'input window, operand 6, single buffered']
    #allocation8 [shape = 'u8[65536]{0}', space=vmem, size = 0x10000, scoped, tag = 'input window, operand 8, single buffered']
    #allocation9 [shape = 's32[1]{0}', space=sflag, size = 0x4, scoped, tag = 'scoped memory for encoder_forward.1']
    #allocation10 [shape = 'u8[512]{0}', space=vmem, size = 0x400, scoped, tag = 'input window, operand 9, single buffered']
    #allocation11 [shape = 'u8[512]{0}', space=vmem, size = 0x400, scoped, tag = 'input window, operand 10, single buffered']
    #allocation12 [shape = 's32[1]{0}', space=sflag, size = 0x4, scoped, tag = 'scoped memory for encoder_forward.1']
    #allocation13 [shape = 'u8[512]{0}', space=vmem, size = 0x400, scoped, tag = 'input window, operand 11, single buffered']
    #allocation14 [shape = 'u8[512]{0}', space=vmem, size = 0x400, scoped, tag = 'input window, operand 12, single buffered']
    #allocation15 [shape = 's32[1]{0}', space=sflag, size = 0x4, scoped, tag = 'scoped memory for encoder_forward.1']
    #allocation16 [shape = 'u8[512]{0}', space=vmem, size = 0x400, scoped, tag = 'input window, operand 13, single buffered']
    #allocation17 [shape = 'u8[4096]{0}', space=vmem, size = 0x1000, scoped, tag = 'output window, operand 0']
    %21 = vsyncpa [#allocation3], 0
    %22 = vsyncpa [#allocation6], 0
    %23 = vsyncpa [#allocation9], 0
    %24 = vsyncpa [#allocation12], 0
    %25 = vsyncpa [#allocation15], 0
    %26 = vsyncpa [#allocation4], 0
    %s27 = scalar_lea.sflag [#allocation4], 1
    %28 = vsyncpa %s27, 0
    loop: start=0, step=1, limit=4
    $region2: #{encoder_forward.1} parent=1 // loop_pre_header
      _
    $region3: #{encoder_forward.1} parent=1 // loop_header
      %s30 = sphi 0, %s34
      %p31 = scmp.ge.s32.totalorder %s30, 4
      %s40 = sphi 0, %s42
      %s43 = sphi 0, %s40
      %s44 = sphi 0, %s43
      %s60 = sphi 0, %s44
      %s66 = sphi 0, %s68
      %s69 = sphi 0, %s66
      %s70 = sphi 0, %s69
      %s86 = sphi 0, %s70
      %s90 = sphi 0, %s90
      %s92 = sphi 0, %s90
      %s93 = sphi 0, %s92
      %s107 = sphi 0, %s93
      %s111 = sphi 0, %s111
      %s113 = sphi 0, %s111
      %s114 = sphi 0, %s113
      %s128 = sphi 0, %s114
      %s132 = sphi 0, %s132
      %s134 = sphi 0, %s132
      %s135 = sphi 0, %s134
      %s149 = sphi 0, %s135
      %s153 = sphi 0, %s153
      %s155 = sphi 0, %s153
      %s156 = sphi 0, %s155
      %s170 = sphi 0, %s156
      %s174 = sphi 0, %s174
      %s176 = sphi 0, %s174
      %s177 = sphi 0, %s176
      %s191 = sphi 0, %s177
      %s195 = sphi 0, %s195
      %s197 = sphi 0, %s195
      %s198 = sphi 0, %s197
      %s212 = sphi 0, %s198
      %s216 = sphi 0, %s216
      %s218 = sphi 0, %s216
      %s219 = sphi 0, %s218
      %s233 = sphi 0, %s219
      %s237 = sphi 0, %s237
      %s239 = sphi 0, %s237
      %s240 = sphi 0, %s239
      %s254 = sphi 0, %s240
      %s258 = sphi 0, %s258
      %s260 = sphi 0, %s258
      %s261 = sphi 0, %s260
      %s275 = sphi 0, %s261
      %s279 = sphi 0, %s279
      %s281 = sphi 0, %s279
      %s282 = sphi 0, %s281
      %s296 = sphi 0, %s282
      %s300 = sphi 0, %s300
      %s302 = sphi 0, %s300
      %s303 = sphi 0, %s302
      %s317 = sphi 0, %s303
      %s321 = sphi 0, %s321
      %s323 = sphi 0, %s321
      %s324 = sphi 0, %s323
      %s338 = sphi 0, %s324
      %s344 = sphi 0, %s346
      %s347 = sphi 0, %s344
      %s348 = sphi 0, %s347
      %s364 = sphi 0, %s348
      %s370 = sphi 0, %s372
      %s373 = sphi 0, %s370
      %s374 = sphi 0, %s373
      %s390 = sphi 0, %s374
    $region4: #{encoder_forward.1} parent=1 // loop_header_branch
      %33 = sbr.rel (%p31) target = $region8
    $region5: #{encoder_forward.1} parent=1 // loop_body
      %s35 = ssub.s32 %s30, 1
      %s36 = ssub.s32 %s30, 2
      %s37 = sadd.s32 %s30, 1
      %s38 = ssub.s32 %s30, %s37
      %p39 = scmp.eq.s32.totalorder %s38, 0
      %s41 = sadd.s32 %s40, 1
      %s42 = scalar_select %p39, %s40, %s41
      %p45 = pneg %p39
      %p46 = scmp.eq.s32.totalorder %s30, 1
      %p47 = por %p45, %p46
      %p48 = scmp.ne.s32.totalorder %s40, %s43
      %p49 = scmp.eq.s32.totalorder %s30, 0
      %p50 = por %p48, %p49
      %p51 = scmp.ne.s32.totalorder %s40, %s43
      %p52 = scmp.eq.s32.totalorder %s35, 1
      %p53 = por %p51, %p52
      %p54 = scmp.ne.s32.totalorder %s43, %s44
      %p55 = scmp.eq.s32.totalorder %s35, 0
      %p56 = por %p54, %p55
      %p57 = scmp.ne.s32.totalorder %s43, %s44
      %p58 = scmp.eq.s32.totalorder %s36, 1
      %p59 = por %p57, %p58
      %p61 = scmp.ne.s32.totalorder %s44, %s60
      %p62 = scmp.eq.s32.totalorder %s36, 0
      %p63 = por %p61, %p62
      %s64 = ssub.s32 %s30, %s37
      %p65 = scmp.eq.s32.totalorder %s64, 0
      %s67 = sadd.s32 %s66, 1
      %s68 = scalar_select %p65, %s66, %s67
      %p71 = pneg %p65
      %p72 = scmp.eq.s32.totalorder %s30, 1
      %p73 = por %p71, %p72
      %p74 = scmp.ne.s32.totalorder %s66, %s69
      %p75 = scmp.eq.s32.totalorder %s30, 0
      %p76 = por %p74, %p75
      %p77 = scmp.ne.s32.totalorder %s66, %s69
      %p78 = scmp.eq.s32.totalorder %s35, 1
      %p79 = por %p77, %p78
      %p80 = scmp.ne.s32.totalorder %s69, %s70
      %p81 = scmp.eq.s32.totalorder %s35, 0
      %p82 = por %p80, %p81
      %p83 = scmp.ne.s32.totalorder %s69, %s70
      %p84 = scmp.eq.s32.totalorder %s36, 1
      %p85 = por %p83, %p84
      %p87 = scmp.ne.s32.totalorder %s70, %s86
      %p88 = scmp.eq.s32.totalorder %s36, 0
      %p89 = por %p87, %p88
      %s91 = sadd.s32 %s90, 1
      %p94 = scmp.eq.s32.totalorder %s30, 1
      %p95 = scmp.ne.s32.totalorder %s90, %s92
      %p96 = scmp.eq.s32.totalorder %s30, 0
      %p97 = por %p95, %p96
      %p98 = scmp.ne.s32.totalorder %s90, %s92
      %p99 = scmp.eq.s32.totalorder %s35, 1
      %p100 = por %p98, %p99
      %p101 = scmp.ne.s32.totalorder %s92, %s93
      %p102 = scmp.eq.s32.totalorder %s35, 0
      %p103 = por %p101, %p102
      %p104 = scmp.ne.s32.totalorder %s92, %s93
      %p105 = scmp.eq.s32.totalorder %s36, 1
      %p106 = por %p104, %p105
      %p108 = scmp.ne.s32.totalorder %s93, %s107
      %p109 = scmp.eq.s32.totalorder %s36, 0
      %p110 = por %p108, %p109
      %s112 = sadd.s32 %s111, 1
      %p115 = scmp.eq.s32.totalorder %s30, 1
      %p116 = scmp.ne.s32.totalorder %s111, %s113
      %p117 = scmp.eq.s32.totalorder %s30, 0
      %p118 = por %p116, %p117
      %p119 = scmp.ne.s32.totalorder %s111, %s113
      %p120 = scmp.eq.s32.totalorder %s35, 1
      %p121 = por %p119, %p120
      %p122 = scmp.ne.s32.totalorder %s113, %s114
      %p123 = scmp.eq.s32.totalorder %s35, 0
      %p124 = por %p122, %p123
      %p125 = scmp.ne.s32.totalorder %s113, %s114
      %p126 = scmp.eq.s32.totalorder %s36, 1
      %p127 = por %p125, %p126
      %p129 = scmp.ne.s32.totalorder %s114, %s128
      %p130 = scmp.eq.s32.totalorder %s36, 0
      %p131 = por %p129, %p130
      %s133 = sadd.s32 %s132, 1
      %p136 = scmp.eq.s32.totalorder %s30, 1
      %p137 = scmp.ne.s32.totalorder %s132, %s134
      %p138 = scmp.eq.s32.totalorder %s30, 0
      %p139 = por %p137, %p138
      %p140 = scmp.ne.s32.totalorder %s132, %s134
      %p141 = scmp.eq.s32.totalorder %s35, 1
      %p142 = por %p140, %p141
      %p143 = scmp.ne.s32.totalorder %s134, %s135
      %p144 = scmp.eq.s32.totalorder %s35, 0
      %p145 = por %p143, %p144
      %p146 = scmp.ne.s32.totalorder %s134, %s135
      %p147 = scmp.eq.s32.totalorder %s36, 1
      %p148 = por %p146, %p147
      %p150 = scmp.ne.s32.totalorder %s135, %s149
      %p151 = scmp.eq.s32.totalorder %s36, 0
      %p152 = por %p150, %p151
      %s154 = sadd.s32 %s153, 1
      %p157 = scmp.eq.s32.totalorder %s30, 1
      %p158 = scmp.ne.s32.totalorder %s153, %s155
      %p159 = scmp.eq.s32.totalorder %s30, 0
      %p160 = por %p158, %p159
      %p161 = scmp.ne.s32.totalorder %s153, %s155
      %p162 = scmp.eq.s32.totalorder %s35, 1
      %p163 = por %p161, %p162
      %p164 = scmp.ne.s32.totalorder %s155, %s156
      %p165 = scmp.eq.s32.totalorder %s35, 0
      %p166 = por %p164, %p165
      %p167 = scmp.ne.s32.totalorder %s155, %s156
      %p168 = scmp.eq.s32.totalorder %s36, 1
      %p169 = por %p167, %p168
      %p171 = scmp.ne.s32.totalorder %s156, %s170
      %p172 = scmp.eq.s32.totalorder %s36, 0
      %p173 = por %p171, %p172
      %s175 = sadd.s32 %s174, 1
      %p178 = scmp.eq.s32.totalorder %s30, 1
      %p179 = scmp.ne.s32.totalorder %s174, %s176
      %p180 = scmp.eq.s32.totalorder %s30, 0
      %p181 = por %p179, %p180
      %p182 = scmp.ne.s32.totalorder %s174, %s176
      %p183 = scmp.eq.s32.totalorder %s35, 1
      %p184 = por %p182, %p183
      %p185 = scmp.ne.s32.totalorder %s176, %s177
      %p186 = scmp.eq.s32.totalorder %s35, 0
      %p187 = por %p185, %p186
      %p188 = scmp.ne.s32.totalorder %s176, %s177
      %p189 = scmp.eq.s32.totalorder %s36, 1
      %p190 = por %p188, %p189
      %p192 = scmp.ne.s32.totalorder %s177, %s191
      %p193 = scmp.eq.s32.totalorder %s36, 0
      %p194 = por %p192, %p193
      %s196 = sadd.s32 %s195, 1
      %p199 = scmp.eq.s32.totalorder %s30, 1
      %p200 = scmp.ne.s32.totalorder %s195, %s197
      %p201 = scmp.eq.s32.totalorder %s30, 0
      %p202 = por %p200, %p201
      %p203 = scmp.ne.s32.totalorder %s195, %s197
      %p204 = scmp.eq.s32.totalorder %s35, 1
      %p205 = por %p203, %p204
      %p206 = scmp.ne.s32.totalorder %s197, %s198
      %p207 = scmp.eq.s32.totalorder %s35, 0
      %p208 = por %p206, %p207
      %p209 = scmp.ne.s32.totalorder %s197, %s198
      %p210 = scmp.eq.s32.totalorder %s36, 1
      %p211 = por %p209, %p210
      %p213 = scmp.ne.s32.totalorder %s198, %s212
      %p214 = scmp.eq.s32.totalorder %s36, 0
      %p215 = por %p213, %p214
      %s217 = sadd.s32 %s216, 1
      %p220 = scmp.eq.s32.totalorder %s30, 1
      %p221 = scmp.ne.s32.totalorder %s216, %s218
      %p222 = scmp.eq.s32.totalorder %s30, 0
      %p223 = por %p221, %p222
      %p224 = scmp.ne.s32.totalorder %s216, %s218
      %p225 = scmp.eq.s32.totalorder %s35, 1
      %p226 = por %p224, %p225
      %p227 = scmp.ne.s32.totalorder %s218, %s219
      %p228 = scmp.eq.s32.totalorder %s35, 0
      %p229 = por %p227, %p228
      %p230 = scmp.ne.s32.totalorder %s218, %s219
      %p231 = scmp.eq.s32.totalorder %s36, 1
      %p232 = por %p230, %p231
      %p234 = scmp.ne.s32.totalorder %s219, %s233
      %p235 = scmp.eq.s32.totalorder %s36, 0
      %p236 = por %p234, %p235
      %s238 = sadd.s32 %s237, 1
      %p241 = scmp.eq.s32.totalorder %s30, 1
      %p242 = scmp.ne.s32.totalorder %s237, %s239
      %p243 = scmp.eq.s32.totalorder %s30, 0
      %p244 = por %p242, %p243
      %p245 = scmp.ne.s32.totalorder %s237, %s239
      %p246 = scmp.eq.s32.totalorder %s35, 1
      %p247 = por %p245, %p246
      %p248 = scmp.ne.s32.totalorder %s239, %s240
      %p249 = scmp.eq.s32.totalorder %s35, 0
      %p250 = por %p248, %p249
      %p251 = scmp.ne.s32.totalorder %s239, %s240
      %p252 = scmp.eq.s32.totalorder %s36, 1
      %p253 = por %p251, %p252
      %p255 = scmp.ne.s32.totalorder %s240, %s254
      %p256 = scmp.eq.s32.totalorder %s36, 0
      %p257 = por %p255, %p256
      %s259 = sadd.s32 %s258, 1
      %p262 = scmp.eq.s32.totalorder %s30, 1
      %p263 = scmp.ne.s32.totalorder %s258, %s260
      %p264 = scmp.eq.s32.totalorder %s30, 0
      %p265 = por %p263, %p264
      %p266 = scmp.ne.s32.totalorder %s258, %s260
      %p267 = scmp.eq.s32.totalorder %s35, 1
      %p268 = por %p266, %p267
      %p269 = scmp.ne.s32.totalorder %s260, %s261
      %p270 = scmp.eq.s32.totalorder %s35, 0
      %p271 = por %p269, %p270
      %p272 = scmp.ne.s32.totalorder %s260, %s261
      %p273 = scmp.eq.s32.totalorder %s36, 1
      %p274 = por %p272, %p273
      %p276 = scmp.ne.s32.totalorder %s261, %s275
      %p277 = scmp.eq.s32.totalorder %s36, 0
      %p278 = por %p276, %p277
      %s280 = sadd.s32 %s279, 1
      %p283 = scmp.eq.s32.totalorder %s30, 1
      %p284 = scmp.ne.s32.totalorder %s279, %s281
      %p285 = scmp.eq.s32.totalorder %s30, 0
      %p286 = por %p284, %p285
      %p287 = scmp.ne.s32.totalorder %s279, %s281
      %p288 = scmp.eq.s32.totalorder %s35, 1
      %p289 = por %p287, %p288
      %p290 = scmp.ne.s32.totalorder %s281, %s282
      %p291 = scmp.eq.s32.totalorder %s35, 0
      %p292 = por %p290, %p291
      %p293 = scmp.ne.s32.totalorder %s281, %s282
      %p294 = scmp.eq.s32.totalorder %s36, 1
      %p295 = por %p293, %p294
      %p297 = scmp.ne.s32.totalorder %s282, %s296
      %p298 = scmp.eq.s32.totalorder %s36, 0
      %p299 = por %p297, %p298
      %s301 = sadd.s32 %s300, 1
      %p304 = scmp.eq.s32.totalorder %s30, 1
      %p305 = scmp.ne.s32.totalorder %s300, %s302
      %p306 = scmp.eq.s32.totalorder %s30, 0
      %p307 = por %p305, %p306
      %p308 = scmp.ne.s32.totalorder %s300, %s302
      %p309 = scmp.eq.s32.totalorder %s35, 1
      %p310 = por %p308, %p309
      %p311 = scmp.ne.s32.totalorder %s302, %s303
      %p312 = scmp.eq.s32.totalorder %s35, 0
      %p313 = por %p311, %p312
      %p314 = scmp.ne.s32.totalorder %s302, %s303
      %p315 = scmp.eq.s32.totalorder %s36, 1
      %p316 = por %p314, %p315
      %p318 = scmp.ne.s32.totalorder %s303, %s317
      %p319 = scmp.eq.s32.totalorder %s36, 0
      %p320 = por %p318, %p319
      %s322 = sadd.s32 %s321, 1
      %p325 = scmp.eq.s32.totalorder %s30, 1
      %p326 = scmp.ne.s32.totalorder %s321, %s323
      %p327 = scmp.eq.s32.totalorder %s30, 0
      %p328 = por %p326, %p327
      %p329 = scmp.ne.s32.totalorder %s321, %s323
      %p330 = scmp.eq.s32.totalorder %s35, 1
      %p331 = por %p329, %p330
      %p332 = scmp.ne.s32.totalorder %s323, %s324
      %p333 = scmp.eq.s32.totalorder %s35, 0
      %p334 = por %p332, %p333
      %p335 = scmp.ne.s32.totalorder %s323, %s324
      %p336 = scmp.eq.s32.totalorder %s36, 1
      %p337 = por %p335, %p336
      %p339 = scmp.ne.s32.totalorder %s324, %s338
      %p340 = scmp.eq.s32.totalorder %s36, 0
      %p341 = por %p339, %p340
      %s342 = ssub.s32 %s30, %s37
      %p343 = scmp.eq.s32.totalorder %s342, 0
      %s345 = sadd.s32 %s344, 1
      %s346 = scalar_select %p343, %s344, %s345
      %p349 = pneg %p343
      %p350 = scmp.eq.s32.totalorder %s30, 1
      %p351 = por %p349, %p350
      %p352 = scmp.ne.s32.totalorder %s344, %s347
      %p353 = scmp.eq.s32.totalorder %s30, 0
      %p354 = por %p352, %p353
      %p355 = scmp.ne.s32.totalorder %s344, %s347
      %p356 = scmp.eq.s32.totalorder %s35, 1
      %p357 = por %p355, %p356
      %p358 = scmp.ne.s32.totalorder %s347, %s348
      %p359 = scmp.eq.s32.totalorder %s35, 0
      %p360 = por %p358, %p359
      %p361 = scmp.ne.s32.totalorder %s347, %s348
      %p362 = scmp.eq.s32.totalorder %s36, 1
      %p363 = por %p361, %p362
      %p365 = scmp.ne.s32.totalorder %s348, %s364
      %p366 = scmp.eq.s32.totalorder %s36, 0
      %p367 = por %p365, %p366
      %s368 = ssub.s32 %s30, %s37
      %p369 = scmp.eq.s32.totalorder %s368, 0
      %s371 = sadd.s32 %s370, 1
      %s372 = scalar_select %p369, %s370, %s371
      %p375 = pneg %p369
      %p376 = scmp.eq.s32.totalorder %s30, 1
      %p377 = por %p375, %p376
      %p378 = scmp.ne.s32.totalorder %s370, %s373
      %p379 = scmp.eq.s32.totalorder %s30, 0
      %p380 = por %p378, %p379
      %p381 = scmp.ne.s32.totalorder %s370, %s373
      %p382 = scmp.eq.s32.totalorder %s35, 1
      %p383 = por %p381, %p382
      %p384 = scmp.ne.s32.totalorder %s373, %s374
      %p385 = scmp.eq.s32.totalorder %s35, 0
      %p386 = por %p384, %p385
      %p387 = scmp.ne.s32.totalorder %s373, %s374
      %p388 = scmp.eq.s32.totalorder %s36, 1
      %p389 = por %p387, %p388
      %p391 = scmp.ne.s32.totalorder %s374, %s390
      %p392 = scmp.eq.s32.totalorder %s36, 0
      %p393 = por %p391, %p392
      %p394 = scmp.le.s32.totalorder 1, %s30
      %p395 = scmp.lt.s32.totalorder %s30, 3
      %p396 = pnand %p394, %p395
      %p397 = pneg %p396
      // Predicated region
      $region9: #{encoder_forward.1} parent=5 // pred_check
        _
      $region10: #{encoder_forward.1} parent=5 // pred_check_branch
        %399 = sbr.rel (%p396) target = $region12
      $region11: #{encoder_forward.1} parent=5 // pred_region
        %s400 = ssub.s32 %s30, 1
        // Predicated region
        $region13: #{encoder_forward.1} parent=11 // pred_check
          %p401 = pneg %p103
        $region14: #{encoder_forward.1} parent=11 // pred_check_branch
          %403 = sbr.rel (%p401) target = $region16
        $region15: #{encoder_forward.1} parent=11 // pred_region
          _
        $region16: #{encoder_forward.1} parent=11 // pred_fallthru
          _
        // Predicated region
        $region17: #{encoder_forward.1} parent=11 // pred_check
          %p404 = pneg %p124
        $region18: #{encoder_forward.1} parent=11 // pred_check_branch
          %406 = sbr.rel (%p404) target = $region20
        $region19: #{encoder_forward.1} parent=11 // pred_region
          _
        $region20: #{encoder_forward.1} parent=11 // pred_fallthru
          _
        // Predicated region
        $region21: #{encoder_forward.1} parent=11 // pred_check
          %p407 = pneg %p145
        $region22: #{encoder_forward.1} parent=11 // pred_check_branch
          %409 = sbr.rel (%p407) target = $region24
        $region23: #{encoder_forward.1} parent=11 // pred_region
          %s411 = ssub.s32 1024, 1024
          %412 = vsyncadd [#allocation3], %s411
          %s413 = sshll.u32 [#allocation2], 4
          %s414 = int_to_ptr.vmem [resolvable:$true] %s413
          %419 = dma.hbm_to_vmem [thread:$0]  %s4, 1024, %s414, [#allocation3], 64, 64, 4
        $region24: #{encoder_forward.1} parent=11 // pred_fallthru
          _
        // Predicated region
        $region25: #{encoder_forward.1} parent=11 // pred_check
          %p420 = pneg %p166
        $region26: #{encoder_forward.1} parent=11 // pred_check_branch
          %422 = sbr.rel (%p420) target = $region28
        $region27: #{encoder_forward.1} parent=11 // pred_region
          %s424 = ssub.s32 16, 16
          %425 = vsyncadd [#allocation6], %s424
          %s427 = sshll.u32 [#allocation5], 4
          %s428 = int_to_ptr.vmem [resolvable:$true] %s427
          %430 = dma.hbm_to_vmem [thread:$0]  %s5, 16, %s428, [#allocation6]
        $region28: #{encoder_forward.1} parent=11 // pred_fallthru
          _
        // Predicated region
        $region29: #{encoder_forward.1} parent=11 // pred_check
          %p431 = pneg %p187
        $region30: #{encoder_forward.1} parent=11 // pred_check_branch
          %433 = sbr.rel (%p431) target = $region32
        $region31: #{encoder_forward.1} parent=11 // pred_region
          %s435 = ssub.s32 2048, 2048
          %436 = vsyncadd [#allocation6], %s435
          %s437 = sshll.u32 [#allocation7], 4
          %s438 = int_to_ptr.vmem [resolvable:$true] %s437
          %443 = dma.hbm_to_vmem [thread:$0]  %s6, 2048, %s438, [#allocation6], 128, 128, 8
        $region32: #{encoder_forward.1} parent=11 // pred_fallthru
          _
        // Predicated region
        $region33: #{encoder_forward.1} parent=11 // pred_check
          %p444 = pneg %p208
        $region34: #{encoder_forward.1} parent=11 // pred_check_branch
          %446 = sbr.rel (%p444) target = $region36
        $region35: #{encoder_forward.1} parent=11 // pred_region
          _
        $region36: #{encoder_forward.1} parent=11 // pred_fallthru
          _
        // Predicated region
        $region37: #{encoder_forward.1} parent=11 // pred_check
          %p447 = pneg %p229
        $region38: #{encoder_forward.1} parent=11 // pred_check_branch
          %449 = sbr.rel (%p447) target = $region40
        $region39: #{encoder_forward.1} parent=11 // pred_region
          %s451 = ssub.s32 2048, 2048
          %452 = vsyncadd [#allocation9], %s451
          %s453 = sshll.u32 [#allocation8], 4
          %s454 = int_to_ptr.vmem [resolvable:$true] %s453
          %459 = dma.hbm_to_vmem [thread:$0]  %s8, 2048, %s454, [#allocation9], 64, 64, 4
        $region40: #{encoder_forward.1} parent=11 // pred_fallthru
          _
        // Predicated region
        $region41: #{encoder_forward.1} parent=11 // pred_check
          %p460 = pneg %p250
        $region42: #{encoder_forward.1} parent=11 // pred_check_branch
          %462 = sbr.rel (%p460) target = $region44
        $region43: #{encoder_forward.1} parent=11 // pred_region
          %s464 = ssub.s32 16, 16
          %465 = vsyncadd [#allocation9], %s464
          %s467 = sshll.u32 [#allocation10], 4
          %s468 = int_to_ptr.vmem [resolvable:$true] %s467
          %470 = dma.hbm_to_vmem [thread:$0]  %s9, 16, %s468, [#allocation9]
        $region44: #{encoder_forward.1} parent=11 // pred_fallthru
          _
        // Predicated region
        $region45: #{encoder_forward.1} parent=11 // pred_check
          %p471 = pneg %p271
        $region46: #{encoder_forward.1} parent=11 // pred_check_branch
          %473 = sbr.rel (%p471) target = $region48
        $region47: #{encoder_forward.1} parent=11 // pred_region
          %s475 = ssub.s32 16, 16
          %476 = vsyncadd [#allocation12], %s475
          %s478 = sshll.u32 [#allocation11], 4
          %s479 = int_to_ptr.vmem [resolvable:$true] %s478
          %481 = dma.hbm_to_vmem [thread:$0]  %s10, 16, %s479, [#allocation12]
        $region48: #{encoder_forward.1} parent=11 // pred_fallthru
          _
        // Predicated region
        $region49: #{encoder_forward.1} parent=11 // pred_check
          %p482 = pneg %p292
        $region50: #{encoder_forward.1} parent=11 // pred_check_branch
          %484 = sbr.rel (%p482) target = $region52
        $region51: #{encoder_forward.1} parent=11 // pred_region
          %s486 = ssub.s32 16, 16
          %487 = vsyncadd [#allocation12], %s486
          %s489 = sshll.u32 [#allocation13], 4
          %s490 = int_to_ptr.vmem [resolvable:$true] %s489
          %492 = dma.hbm_to_vmem [thread:$0]  %s11, 16, %s490, [#allocation12]
        $region52: #{encoder_forward.1} parent=11 // pred_fallthru
          _
        // Predicated region
        $region53: #{encoder_forward.1} parent=11 // pred_check
          %p493 = pneg %p313
        $region54: #{encoder_forward.1} parent=11 // pred_check_branch
          %495 = sbr.rel (%p493) target = $region56
        $region55: #{encoder_forward.1} parent=11 // pred_region
          %s497 = ssub.s32 16, 16
          %498 = vsyncadd [#allocation15], %s497
          %s500 = sshll.u32 [#allocation14], 4
          %s501 = int_to_ptr.vmem [resolvable:$true] %s500
          %503 = dma.hbm_to_vmem [thread:$0]  %s12, 16, %s501, [#allocation15]
        $region56: #{encoder_forward.1} parent=11 // pred_fallthru
          _
        // Predicated region
        $region57: #{encoder_forward.1} parent=11 // pred_check
          %p504 = pneg %p334
        $region58: #{encoder_forward.1} parent=11 // pred_check_branch
          %506 = sbr.rel (%p504) target = $region60
        $region59: #{encoder_forward.1} parent=11 // pred_region
          %s508 = ssub.s32 16, 16
          %509 = vsyncadd [#allocation15], %s508
          %s511 = sshll.u32 [#allocation16], 4
          %s512 = int_to_ptr.vmem [resolvable:$true] %s511
          %514 = dma.hbm_to_vmem [thread:$0]  %s13, 16, %s512, [#allocation15]
        $region60: #{encoder_forward.1} parent=11 // pred_fallthru
          _
      $region12: #{encoder_forward.1} parent=5 // pred_fallthru
        _
      %p515 = scmp.lt.s32.totalorder %s30, 2
      // Predicated region
      $region61: #{encoder_forward.1} parent=5 // pred_check
        %p516 = pneg %p515
      $region62: #{encoder_forward.1} parent=5 // pred_check_branch
        %518 = sbr.rel (%p516) target = $region64
      $region63: #{encoder_forward.1} parent=5 // pred_region
        // Predicated region
        $region65: #{encoder_forward.1} parent=63 // pred_check
          %p519 = pneg %p50
        $region66: #{encoder_forward.1} parent=63 // pred_check_branch
          %521 = sbr.rel (%p519) target = $region68
        $region67: #{encoder_forward.1} parent=63 // pred_region
          %p522 = scmp.lt.s32.totalorder %s30, 1
          %s523 = scalar_select %p522, %s30, 1
          %s524 = smul.addr %s523, 4
          %s525 = scalar_lea.vmem %s0, %s524
        $region68: #{encoder_forward.1} parent=63 // pred_fallthru
          _
        // Predicated region
        $region69: #{encoder_forward.1} parent=63 // pred_check
          %p526 = pneg %p76
        $region70: #{encoder_forward.1} parent=63 // pred_check_branch
          %528 = sbr.rel (%p526) target = $region72
        $region71: #{encoder_forward.1} parent=63 // pred_region
          %p529 = scmp.lt.s32.totalorder %s30, 1
          %s530 = scalar_select %p529, %s30, 1
          %s531 = scalar_lea.vmem %s1, %s530
        $region72: #{encoder_forward.1} parent=63 // pred_fallthru
          _
      $region64: #{encoder_forward.1} parent=5 // pred_fallthru
        _
      %p532 = scmp.le.s32.totalorder 1, %s30
      %p533 = scmp.lt.s32.totalorder %s30, 3
      %p534 = pnand %p532, %p533
      %p535 = pneg %p534
      // Predicated region
      $region73: #{encoder_forward.1} parent=5 // pred_check
        _
      $region74: #{encoder_forward.1} parent=5 // pred_check_branch
        %537 = sbr.rel (%p534) target = $region76
      $region75: #{encoder_forward.1} parent=5 // pred_region
        %s538 = ssub.s32 %s30, 1
        // Predicated region
        $region77: #{encoder_forward.1} parent=75 // pred_check
          %p539 = pneg %p145
        $region78: #{encoder_forward.1} parent=75 // pred_check_branch
          %541 = sbr.rel (%p539) target = $region80
        $region79: #{encoder_forward.1} parent=75 // pred_region
          %542 = dma.done [#allocation3], 1024
        $region80: #{encoder_forward.1} parent=75 // pred_fallthru
          _
        // Predicated region
        $region81: #{encoder_forward.1} parent=75 // pred_check
          %p543 = pneg %p166
        $region82: #{encoder_forward.1} parent=75 // pred_check_branch
          %545 = sbr.rel (%p543) target = $region84
        $region83: #{encoder_forward.1} parent=75 // pred_region
          %546 = dma.done [#allocation6], 16
        $region84: #{encoder_forward.1} parent=75 // pred_fallthru
          _
        // Predicated region
        $region85: #{encoder_forward.1} parent=75 // pred_check
          %p547 = pneg %p187
        $region86: #{encoder_forward.1} parent=75 // pred_check_branch
          %549 = sbr.rel (%p547) target = $region88
        $region87: #{encoder_forward.1} parent=75 // pred_region
          %550 = dma.done [#allocation6], 2048
        $region88: #{encoder_forward.1} parent=75 // pred_fallthru
          _
        // Predicated region
        $region89: #{encoder_forward.1} parent=75 // pred_check
          %p551 = pneg %p229
        $region90: #{encoder_forward.1} parent=75 // pred_check_branch
          %553 = sbr.rel (%p551) target = $region92
        $region91: #{encoder_forward.1} parent=75 // pred_region
          %554 = dma.done [#allocation9], 2048
        $region92: #{encoder_forward.1} parent=75 // pred_fallthru
          _
        // Predicated region
        $region93: #{encoder_forward.1} parent=75 // pred_check
          %p555 = pneg %p250
        $region94: #{encoder_forward.1} parent=75 // pred_check_branch
          %557 = sbr.rel (%p555) target = $region96
        $region95: #{encoder_forward.1} parent=75 // pred_region
          %558 = dma.done [#allocation9], 16
        $region96: #{encoder_forward.1} parent=75 // pred_fallthru
          _
        // Predicated region
        $region97: #{encoder_forward.1} parent=75 // pred_check
          %p559 = pneg %p271
        $region98: #{encoder_forward.1} parent=75 // pred_check_branch
          %561 = sbr.rel (%p559) target = $region100
        $region99: #{encoder_forward.1} parent=75 // pred_region
          %562 = dma.done [#allocation12], 16
        $region100: #{encoder_forward.1} parent=75 // pred_fallthru
          _
        // Predicated region
        $region101: #{encoder_forward.1} parent=75 // pred_check
          %p563 = pneg %p292
        $region102: #{encoder_forward.1} parent=75 // pred_check_branch
          %565 = sbr.rel (%p563) target = $region104
        $region103: #{encoder_forward.1} parent=75 // pred_region
          %566 = dma.done [#allocation12], 16
        $region104: #{encoder_forward.1} parent=75 // pred_fallthru
          _
        // Predicated region
        $region105: #{encoder_forward.1} parent=75 // pred_check
          %p567 = pneg %p313
        $region106: #{encoder_forward.1} parent=75 // pred_check_branch
          %569 = sbr.rel (%p567) target = $region108
        $region107: #{encoder_forward.1} parent=75 // pred_region
          %570 = dma.done [#allocation15], 16
        $region108: #{encoder_forward.1} parent=75 // pred_fallthru
          _
        // Predicated region
        $region109: #{encoder_forward.1} parent=75 // pred_check
          %p571 = pneg %p334
        $region110: #{encoder_forward.1} parent=75 // pred_check_branch
          %573 = sbr.rel (%p571) target = $region112
        $region111: #{encoder_forward.1} parent=75 // pred_region
          %574 = dma.done [#allocation15], 16
        $region112: #{encoder_forward.1} parent=75 // pred_fallthru
          _
        %p575 = scmp.lt.s32.totalorder %s35, 1
        %s576 = scalar_select %p575, %s35, 1
        %s577 = smul.addr %s576, 4
        %s578 = scalar_lea.vmem %s0, %s577
        %p579 = pneg %p56
        %p580 = pneg %p53
        %p581 = scmp.lt.s32.totalorder %s35, 1
        %s582 = scalar_select %p581, %s35, 1
        %s583 = scalar_lea.vmem %s1, %s582
        %p584 = pneg %p82
        %p585 = pneg %p79
        %p586 = pneg %p103
        %p587 = pneg %p100
        %p588 = pneg %p124
        %p589 = pneg %p121
        %p590 = pneg %p145
        %p591 = pneg %p142
        %p592 = pneg %p166
        %p593 = pneg %p163
        %p594 = pneg %p187
        %p595 = pneg %p184
        %p596 = pneg %p208
        %p597 = pneg %p205
        %p598 = pneg %p229
        %p599 = pneg %p226
        %p600 = pneg %p250
        %p601 = pneg %p247
        %p602 = pneg %p271
        %p603 = pneg %p268
        %p604 = pneg %p292
        %p605 = pneg %p289
        %p606 = pneg %p313
        %p607 = pneg %p310
        %p608 = pneg %p334
        %p609 = pneg %p331
        %p610 = pneg %p360
        %p611 = pneg %p357
        %s612 = sand.u32 %s347, 1
        %s613 = scalar_lea.sflag [#allocation4], %s612
        %s614 = sand.u32 %s347, 1
        %s615 = smul.addr %s614, 4
        %s616 = scalar_lea.vmem [#allocation17], %s615
        %p617 = pneg %p386
        %p618 = pneg %p383
        %p619 = scmp.lt.s32.totalorder %s35, 1
        %s620 = scalar_select %p619, %s35, 1
        %s621 = scalar_lea.vmem %s15, %s620
        %p622 = scmp.lt.s32.totalorder %s35, 1
        %s623 = scalar_select %p622, %s35, 1
        %s624 = smul.addr %s623, 4
        %s625 = scalar_lea.vmem %s0, %s624
        %p626 = scmp.lt.s32.totalorder %s35, 1
        %s627 = scalar_select %p626, %s35, 1
        %s628 = scalar_lea.vmem %s1, %s627
        %p629 = scmp.lt.s32.totalorder %s35, 1
        %s630 = scalar_select %p629, %s35, 1
        %s631 = scalar_lea.vmem %s15, %s630
        %v633 = vld [vmem:[%s625] sm:$0xf]
        %v634 = vld [vmem:[%s628] sm:$0x1]
        %v635 = vsub.f32 1.0, %v634
        %v636 = vmul.f32 %v635, -1e+09
        %v637 = vld [vmem:[%s2] sm:$0xff]
        %v638 = vld [vmem:[%s2 + $0x8] sm:$0xf]
        %v639 = vld [vmem:[%s2 + $0xc] sm:$0xff]
        %v640 = vld [vmem:[%s2 + $0x14] sm:$0xf]
        %v641 = vld [vmem:[%s2 + $0x18] sm:$0xff]
        %v642 = vld [vmem:[%s2 + $0x20] sm:$0xf]
        %v643 = vld [vmem:[%s2 + $0x24] sm:$0xff]
        %v644 = vld [vmem:[%s2 + $0x2c] sm:$0xf]
        %v645 = vld [vmem:[%s2 + $0x30] sm:$0xff]
        %v646 = vld [vmem:[%s2 + $0x38] sm:$0xf]
        %v647 = vld [vmem:[%s2 + $0x3c] sm:$0xff]
        %v648 = vld [vmem:[%s2 + $0x44] sm:$0xf]
        %v649 = vld [vmem:[%s2 + $0x48] sm:$0xff]
        %v650 = vld [vmem:[%s2 + $0x50] sm:$0xf]
        %v651 = vld [vmem:[%s2 + $0x54] sm:$0xff]
        %v652 = vld [vmem:[%s2 + $0x5c] sm:$0xf]
        %v653 = vld [vmem:[%s2 + $0x60] sm:$0xff]
        %v654 = vld [vmem:[%s2 + $0x68] sm:$0xf]
        %v655 = vld [vmem:[%s2 + $0x6c] sm:$0xff]
        %v656 = vld [vmem:[%s2 + $0x74] sm:$0xf]
        %v657 = vld [vmem:[%s2 + $0x78] sm:$0xff]
        %v658 = vld [vmem:[%s2 + $0x80] sm:$0xf]
        %v659 = vld [vmem:[%s2 + $0x84] sm:$0xff]
        %v660 = vld [vmem:[%s2 + $0x8c] sm:$0xf]
        %v661 = vld [vmem:[%s2 + $0x90] sm:$0xff]
        %v662 = vld [vmem:[%s2 + $0x98] sm:$0xf]
        %v663 = vld [vmem:[%s2 + $0x9c] sm:$0xff]
        %v664 = vld [vmem:[%s2 + $0xa4] sm:$0xf]
        %v665 = vld [vmem:[%s2 + $0xa8] sm:$0xff]
        %v666 = vld [vmem:[%s2 + $0xb0] sm:$0xf]
        %v667 = vld [vmem:[%s2 + $0xb4] sm:$0xff]
        %v668 = vld [vmem:[%s2 + $0xbc] sm:$0xf]
        %v669 = vld [vmem:[%s3] sm:$0x7]
        %v670 = vunpack.c.l.bf16 %v669
        %v672 = vlaneseq
        %v673 = vshrl.u32 %v672, 7
        %v674 = vsub.s32 0, %v673
        %v675 = vrot.slane %v670, %v674
        %v676 = vlaneseq
        %v677 = vshrl.u32 %v676, 7
        %v678 = vsub.s32 2, %v677
        %v679 = vrot.slane %v670, %v678
        %v680 = vlaneseq
        %v681 = vshrl.u32 %v680, 7
        %v682 = vsub.s32 4, %v681
        %v683 = vrot.slane %v670, %v682
        %v687 = vlaneseq
        %v688 = vshrl.u32 %v687, 7
        %v689 = vsub.s32 0, %v688
        %v690 = vrot.slane %v675, %v689
        %v691 = vlaneseq
        %v692 = vshrl.u32 %v691, 7
        %v693 = vsub.s32 0, %v692
        %v694 = vrot.slane %v679, %v693
        %v695 = vlaneseq
        %v696 = vshrl.u32 %v695, 7
        %v697 = vsub.s32 0, %v696
        %v698 = vrot.slane %v683, %v697
        %v731 = vunpack.c.l.b16 %v637
        %v732 = vunpack.c.h.b16 %v637
        %v733 = vunpack.c.l.b16 %v638
        %v734 = vunpack.c.l.b16 %v639
        %v735 = vunpack.c.h.b16 %v639
        %v736 = vunpack.c.l.b16 %v640
        %v737 = vunpack.c.l.b16 %v641
        %v738 = vunpack.c.h.b16 %v641
        %v739 = vunpack.c.l.b16 %v642
        %v740 = vunpack.c.l.b16 %v643
        %v741 = vunpack.c.h.b16 %v643
        %v742 = vunpack.c.l.b16 %v644
        %v743 = vunpack.c.l.b16 %v645
        %v744 = vunpack.c.h.b16 %v645
        %v745 = vunpack.c.l.b16 %v646
        %v746 = vunpack.c.l.b16 %v647
        %v747 = vunpack.c.h.b16 %v647
        %v748 = vunpack.c.l.b16 %v648
        %v749 = vunpack.c.l.b16 %v649
        %v750 = vunpack.c.h.b16 %v649
        %v751 = vunpack.c.l.b16 %v650
        %v752 = vunpack.c.l.b16 %v651
        %v753 = vunpack.c.h.b16 %v651
        %v754 = vunpack.c.l.b16 %v652
        %v755 = vunpack.c.l.b16 %v653
        %v756 = vunpack.c.h.b16 %v653
        %v757 = vunpack.c.l.b16 %v654
        %v758 = vunpack.c.l.b16 %v655
        %v759 = vunpack.c.h.b16 %v655
        %v760 = vunpack.c.l.b16 %v656
        %v761 = vunpack.c.l.b16 %v657
        %v762 = vunpack.c.h.b16 %v657
        %v763 = vunpack.c.l.b16 %v658
        %v764 = vunpack.c.l.b16 %v659
        %v765 = vunpack.c.h.b16 %v659
        %v766 = vunpack.c.l.b16 %v660
        %v767 = vunpack.c.l.b16 %v661
        %v768 = vunpack.c.h.b16 %v661
        %v769 = vunpack.c.l.b16 %v662
        %v770 = vunpack.c.l.b16 %v663
        %v771 = vunpack.c.h.b16 %v663
        %v772 = vunpack.c.l.b16 %v664
        %v773 = vunpack.c.l.b16 %v665
        %v774 = vunpack.c.h.b16 %v665
        %v775 = vunpack.c.l.b16 %v666
        %v776 = vunpack.c.l.b16 %v667
        %v777 = vunpack.c.h.b16 %v667
        %v778 = vunpack.c.l.b16 %v668
        %v779 = vpack.c.b16 %v734, %v731
        %v780 = vpack.c.b16 %v735, %v732
        %v781 = vpack.c.b16 %v736, %v733
        %v782 = vpack.c.b16 %v740, %v737
        %v783 = vpack.c.b16 %v741, %v738
        %v784 = vpack.c.b16 %v742, %v739
        %v785 = vpack.c.b16 %v746, %v743
        %v786 = vpack.c.b16 %v747, %v744
        %v787 = vpack.c.b16 %v748, %v745
        %v788 = vpack.c.b16 %v752, %v749
        %v789 = vpack.c.b16 %v753, %v750
        %v790 = vpack.c.b16 %v754, %v751
        %v791 = vpack.c.b16 %v758, %v755
        %v792 = vpack.c.b16 %v759, %v756
        %v793 = vpack.c.b16 %v760, %v757
        %v794 = vpack.c.b16 %v764, %v761
        %v795 = vpack.c.b16 %v765, %v762
        %v796 = vpack.c.b16 %v766, %v763
        %v797 = vpack.c.b16 %v770, %v767
        %v798 = vpack.c.b16 %v771, %v768
        %v799 = vpack.c.b16 %v772, %v769
        %v800 = vpack.c.b16 %v776, %v773
        %v801 = vpack.c.b16 %v777, %v774
        %v802 = vpack.c.b16 %v778, %v775
        %827 = vmatprep.subr.bf16.mxu0 %v780
        %828 = vmatpush1.bf16.msra.mxu0 %v779
        %829 = vmatprep.subr.bf16.mxu0 %v783
        %830 = vmatpush1.bf16.msra.mxu0 %v782
        %831 = vmatprep.subr.bf16.mxu0 %v786
        %832 = vmatpush1.bf16.msra.mxu0 %v785
        %833 = vmatprep.subr.bf16.mxu0 %v789
        %834 = vmatpush1.bf16.msra.mxu0 %v788
        %835 = vmatprep.subr.bf16.mxu0 %v792
        %836 = vmatpush1.bf16.msra.mxu0 %v791
        %837 = vmatprep.subr.bf16.mxu0 %v795
        %838 = vmatpush1.bf16.msra.mxu0 %v794
        %839 = vmatprep.subr.bf16.mxu0 %v798
        %840 = vmatpush1.bf16.msra.mxu0 %v797
        %841 = vmatprep.subr.bf16.mxu0 %v801
        %842 = vmatpush1.bf16.msra.mxu0 %v800
        %843 = vmatprep.subr.bf16.mxu0 0
        %844 = vmatpush1.bf16.msra.mxu0 0
        %845 = vmatprep.subr.bf16.mxu0 0
        %846 = vmatpush1.bf16.msra.mxu0 0
        %847 = vmatprep.subr.bf16.mxu0 0
        %848 = vmatpush1.bf16.msra.mxu0 0
        %849 = vmatprep.subr.bf16.mxu0 0
        %850 = vmatpush1.bf16.msra.mxu0 0
        %851 = vmatprep.subr.bf16.mxu0 0
        %852 = vmatpush1.bf16.msra.mxu0 0
        %853 = vmatprep.subr.bf16.mxu0 0
        %854 = vmatpush1.bf16.msra.mxu0 0
        %855 = vmatprep.subr.bf16.mxu0 0
        %856 = vmatpush1.bf16.msra.mxu0 0
        %857 = vmatprep.subr.bf16.mxu0 0
        %858 = vmatpush1.bf16.msra.mxu0 0
        %859 = vmatprep.mubr.bf16.mxu0 0
        %860 = vmatmul.mubr.bf16.gmra.mrb[0].mxu0 %v633
        %v861 = vpop.f32.mrb[0].mxu0
        %v862 = vadd.f32 %v690, %v861
        %v863 = vpop.f32.mrb[0].mxu0
        %v864 = vadd.f32 %v694, %v863
        %v865 = vpop.f32.mrb[0].mxu0
        %v866 = vpop.f32.mrb[0].mxu0
        %867 = vdwg.mxu0
        %868 = vmatprep.subr.bf16.mxu0 0
        %869 = vmatpush1.bf16.msra.mxu0 %v781
        %870 = vmatprep.subr.bf16.mxu0 0
        %871 = vmatpush1.bf16.msra.mxu0 %v784
        %872 = vmatprep.subr.bf16.mxu0 0
        %873 = vmatpush1.bf16.msra.mxu0 %v787
        %874 = vmatprep.subr.bf16.mxu0 0
        %875 = vmatpush1.bf16.msra.mxu0 %v790
        %876 = vmatprep.subr.bf16.mxu0 0
        %877 = vmatpush1.bf16.msra.mxu0 %v793
        %878 = vmatprep.subr.bf16.mxu0 0
        %879 = vmatpush1.bf16.msra.mxu0 %v796
        %880 = vmatprep.subr.bf16.mxu0 0
        %881 = vmatpush1.bf16.msra.mxu0 %v799
        %882 = vmatprep.subr.bf16.mxu0 0
        %883 = vmatpush1.bf16.msra.mxu0 %v802
        %884 = vmatprep.subr.bf16.mxu0 0
        %885 = vmatpush1.bf16.msra.mxu0 0
        %886 = vmatprep.subr.bf16.mxu0 0
        %887 = vmatpush1.bf16.msra.mxu0 0
        %888 = vmatprep.subr.bf16.mxu0 0
        %889 = vmatpush1.bf16.msra.mxu0 0
        %890 = vmatprep.subr.bf16.mxu0 0
        %891 = vmatpush1.bf16.msra.mxu0 0
        %892 = vmatprep.subr.bf16.mxu0 0
        %893 = vmatpush1.bf16.msra.mxu0 0
        %894 = vmatprep.subr.bf16.mxu0 0
        %895 = vmatpush1.bf16.msra.mxu0 0
        %896 = vmatprep.subr.bf16.mxu0 0
        %897 = vmatpush1.bf16.msra.mxu0 0
        %898 = vmatprep.subr.bf16.mxu0 0
        %899 = vmatpush1.bf16.msra.mxu0 0
        %900 = vmatprep.mubr.bf16.mxu0 0
        %901 = vmatmul.mubr.bf16.gmra.mrb[0].mxu0 %v633
        %v902 = vpop.f32.mrb[0].mxu0
        %v903 = vadd.f32 %v698, %v902
        %v904 = vpop.f32.mrb[0].mxu0
        %v905 = vpop.f32.mrb[0].mxu0
        %v906 = vpop.f32.mrb[0].mxu0
        %907 = vdwg.mxu0
        %v908 = vpack.c.bf16 %v862, %v862
        %v909 = vpack.c.bf16 %v864, %v864
        %v910 = vpack.c.bf16 %v903, %v903
        %vm911 = vcmask 523264
        %v913 = vsel %vm911, %v908, 0
        %v916 = vsel %vm911, %v909, 0
        %918 = vmatprep.subr.bf16.mxu0 0
        %919 = vmatpush1.bf16.xpose.msra.mxu0 %v916
        %920 = vmatprep.subr.bf16.mxu0 0
        %921 = vmatpush1.bf16.xpose.msra.mxu0 0
        %922 = vmatprep.subr.bf16.mxu0 0
        %923 = vmatpush1.bf16.xpose.msra.mxu0 0
        %924 = vmatprep.subr.bf16.mxu0 0
        %925 = vmatpush1.bf16.xpose.msra.mxu0 0
        %926 = vmatprep.subr.bf16.mxu0 0
        %927 = vmatpush1.bf16.xpose.msra.mxu0 0
        %928 = vmatprep.subr.bf16.mxu0 0
        %929 = vmatpush1.bf16.xpose.msra.mxu0 0
        %930 = vmatprep.subr.bf16.mxu0 0
        %931 = vmatpush1.bf16.xpose.msra.mxu0 0
        %932 = vmatprep.subr.bf16.mxu0 0
        %933 = vmatpush1.bf16.xpose.msra.mxu0 0
        %934 = vmatprep.subr.bf16.mxu0 0
        %935 = vmatpush1.bf16.xpose.msra.mxu0 0
        %936 = vmatprep.subr.bf16.mxu0 0
        %937 = vmatpush1.bf16.xpose.msra.mxu0 0
        %938 = vmatprep.subr.bf16.mxu0 0
        %939 = vmatpush1.bf16.xpose.msra.mxu0 0
        %940 = vmatprep.subr.bf16.mxu0 0
        %941 = vmatpush1.bf16.xpose.msra.mxu0 0
        %942 = vmatprep.subr.bf16.mxu0 0
        %943 = vmatpush1.bf16.xpose.msra.mxu0 0
        %944 = vmatprep.subr.bf16.mxu0 0
        %945 = vmatpush1.bf16.xpose.msra.mxu0 0
        %946 = vmatprep.subr.bf16.mxu0 0
        %947 = vmatpush1.bf16.xpose.msra.mxu0 0
        %948 = vmatprep.subr.bf16.mxu0 0
        %949 = vmatpush1.bf16.xpose.msra.mxu0 0
        %950 = vmatprep.mubr.bf16.mxu0 0
        %951 = vmatmul.mubr.bf16.gmra.mrb[0].mxu0 %v913
        %v952 = vpop.f32.mrb[0].mxu0
        %v953 = vadd.f32 0.0, %v952
        %v954 = vpop.f32.mrb[0].mxu0
        %v955 = vpop.f32.mrb[0].mxu0
        %v956 = vpop.f32.mrb[0].mxu0
        %957 = vdwg.mxu0
        %v958 = vmul.f32 %v953, 0.125
        %v960 = vlaneseq
        %v961 = vshrl.u32 %v960, 7
        %v962 = vsub.s32 0, %v961
        %v963 = vrot.slane %v636, %v962
        %v965 = vadd.f32 %v958, %v963
        %vm966 = vcmask 64512
        %v967 = vsel %vm966, %v965, -inf
        %968 = vmax.xlane.f32.xlu0 %v967
        %v969 = vpop.xlane.xlu0 %968
        %v970 = vsub.f32 %v965, %v969
        %v971 = vmul.f32 %v970, 1.442695
        %v972 = vpow.pop %v971
        %v973 = vsel %vm966, %v972, 0.0
        %974 = vadd.xlane.f32.xlu0 %v973
        %v975 = vpop.xlane.xlu0 %974
        %v976 = vrcp.pop %v975
        %v977 = vmul.f32 %v972, %v976
        %v978 = vpack.c.bf16 %v977, %v977
        %v980 = vsel %vm966, %v978, 0
        %vm982 = vcmask 1043456
        %v984 = vsel %vm982, %v910, 0
        %986 = vmatprep.subr.bf16.mxu0 0
        %987 = vmatpush1.bf16.msra.mxu0 %v984
        %988 = vmatprep.subr.bf16.mxu0 0
        %989 = vmatpush1.bf16.msra.mxu0 0
        %990 = vmatprep.subr.bf16.mxu0 0
        %991 = vmatpush1.bf16.msra.mxu0 0
        %992 = vmatprep.subr.bf16.mxu0 0
        %993 = vmatpush1.bf16.msra.mxu0 0
        %994 = vmatprep.subr.bf16.mxu0 0
        %995 = vmatpush1.bf16.msra.mxu0 0
        %996 = vmatprep.subr.bf16.mxu0 0
        %997 = vmatpush1.bf16.msra.mxu0 0
        %998 = vmatprep.subr.bf16.mxu0 0
        %999 = vmatpush1.bf16.msra.mxu0 0
        %1000 = vmatprep.subr.bf16.mxu0 0
        %1001 = vmatpush1.bf16.msra.mxu0 0
        %1002 = vmatprep.subr.bf16.mxu0 0
        %1003 = vmatpush1.bf16.msra.mxu0 0
        %1004 = vmatprep.subr.bf16.mxu0 0
        %1005 = vmatpush1.bf16.msra.mxu0 0
        %1006 = vmatprep.subr.bf16.mxu0 0
        %1007 = vmatpush1.bf16.msra.mxu0 0
        %1008 = vmatprep.subr.bf16.mxu0 0
        %1009 = vmatpush1.bf16.msra.mxu0 0
        %1010 = vmatprep.subr.bf16.mxu0 0
        %1011 = vmatpush1.bf16.msra.mxu0 0
        %1012 = vmatprep.subr.bf16.mxu0 0
        %1013 = vmatpush1.bf16.msra.mxu0 0
        %1014 = vmatprep.subr.bf16.mxu0 0
        %1015 = vmatpush1.bf16.msra.mxu0 0
        %1016 = vmatprep.subr.bf16.mxu0 0
        %1017 = vmatpush1.bf16.msra.mxu0 0
        %1018 = vmatprep.mubr.bf16.mxu0 0
        %1019 = vmatmul.mubr.bf16.gmra.mrb[0].mxu0 %v980
        %v1020 = vpop.f32.mrb[0].mxu0
        %v1021 = vadd.f32 0.0, %v1020
        %v1022 = vpop.f32.mrb[0].mxu0
        %v1023 = vpop.f32.mrb[0].mxu0
        %v1024 = vpop.f32.mrb[0].mxu0
        %1025 = vdwg.mxu0
        %1027 = vrot.lane.b32.xlu0 %v908, 64
        %v1028 = vpop.permute.xlu0 %1027
        %1030 = vrot.lane.b32.xlu0 %v909, 64
        %v1031 = vpop.permute.xlu0 %1030
        %v1033 = vsel %vm911, %v1028, 0
        %v1036 = vsel %vm911, %v1031, 0
        %1038 = vmatprep.subr.bf16.mxu0 0
        %1039 = vmatpush1.bf16.xpose.msra.mxu0 %v1036
        %1040 = vmatprep.subr.bf16.mxu0 0
        %1041 = vmatpush1.bf16.xpose.msra.mxu0 0
        %1042 = vmatprep.subr.bf16.mxu0 0
        %1043 = vmatpush1.bf16.xpose.msra.mxu0 0
        %1044 = vmatprep.subr.bf16.mxu0 0
        %1045 = vmatpush1.bf16.xpose.msra.mxu0 0
        %1046 = vmatprep.subr.bf16.mxu0 0
        %1047 = vmatpush1.bf16.xpose.msra.mxu0 0
        %1048 = vmatprep.subr.bf16.mxu0 0
        %1049 = vmatpush1.bf16.xpose.msra.mxu0 0
        %1050 = vmatprep.subr.bf16.mxu0 0
        %1051 = vmatpush1.bf16.xpose.msra.mxu0 0
        %1052 = vmatprep.subr.bf16.mxu0 0
        %1053 = vmatpush1.bf16.xpose.msra.mxu0 0
        %1054 = vmatprep.subr.bf16.mxu0 0
        %1055 = vmatpush1.bf16.xpose.msra.mxu0 0
        %1056 = vmatprep.subr.bf16.mxu0 0
        %1057 = vmatpush1.bf16.xpose.msra.mxu0 0
        %1058 = vmatprep.subr.bf16.mxu0 0
        %1059 = vmatpush1.bf16.xpose.msra.mxu0 0
        %1060 = vmatprep.subr.bf16.mxu0 0
        %1061 = vmatpush1.bf16.xpose.msra.mxu0 0
        %1062 = vmatprep.subr.bf16.mxu0 0
        %1063 = vmatpush1.bf16.xpose.msra.mxu0 0
        %1064 = vmatprep.subr.bf16.mxu0 0
        %1065 = vmatpush1.bf16.xpose.msra.mxu0 0
        %1066 = vmatprep.subr.bf16.mxu0 0
        %1067 = vmatpush1.bf16.xpose.msra.mxu0 0
        %1068 = vmatprep.subr.bf16.mxu0 0
        %1069 = vmatpush1.bf16.xpose.msra.mxu0 0
        %1070 = vmatprep.mubr.bf16.mxu0 0
        %1071 = vmatmul.mubr.bf16.gmra.mrb[0].mxu0 %v1033
        %v1072 = vpop.f32.mrb[0].mxu0
        %v1073 = vadd.f32 0.0, %v1072
        %v1074 = vpop.f32.mrb[0].mxu0
        %v1075 = vpop.f32.mrb[0].mxu0
        %v1076 = vpop.f32.mrb[0].mxu0
        %1077 = vdwg.mxu0
        %v1078 = vmul.f32 %v1073, 0.125
        %v1079 = vadd.f32 %v1078, %v963
        %v1080 = vsel %vm966, %v1079, -inf
        %1081 = vmax.xlane.f32.xlu0 %v1080
        %v1082 = vpop.xlane.xlu0 %1081
        %v1083 = vsub.f32 %v1079, %v1082
        %v1084 = vmul.f32 %v1083, 1.442695
        %v1085 = vpow.pop %v1084
        %v1086 = vsel %vm966, %v1085, 0.0
        %1087 = vadd.xlane.f32.xlu0 %v1086
        %v1088 = vpop.xlane.xlu0 %1087
        %v1089 = vrcp.pop %v1088
        %v1090 = vmul.f32 %v1085, %v1089
        %v1091 = vpack.c.bf16 %v1090, %v1090
        %1093 = vrot.lane.b32.xlu0 %v910, 64
        %v1094 = vpop.permute.xlu0 %1093
        %v1096 = vsel %vm966, %v1091, 0
        %v1099 = vsel %vm982, %v1094, 0
        %1101 = vmatprep.subr.bf16.mxu0 0
        %1102 = vmatpush1.bf16.msra.mxu0 %v1099
        %1103 = vmatprep.subr.bf16.mxu0 0
        %1104 = vmatpush1.bf16.msra.mxu0 0
        %1105 = vmatprep.subr.bf16.mxu0 0
        %1106 = vmatpush1.bf16.msra.mxu0 0
        %1107 = vmatprep.subr.bf16.mxu0 0
        %1108 = vmatpush1.bf16.msra.mxu0 0
        %1109 = vmatprep.subr.bf16.mxu0 0
        %1110 = vmatpush1.bf16.msra.mxu0 0
        %1111 = vmatprep.subr.bf16.mxu0 0
        %1112 = vmatpush1.bf16.msra.mxu0 0
        %1113 = vmatprep.subr.bf16.mxu0 0
        %1114 = vmatpush1.bf16.msra.mxu0 0
        %1115 = vmatprep.subr.bf16.mxu0 0
        %1116 = vmatpush1.bf16.msra.mxu0 0
        %1117 = vmatprep.subr.bf16.mxu0 0
        %1118 = vmatpush1.bf16.msra.mxu0 0
        %1119 = vmatprep.subr.bf16.mxu0 0
        %1120 = vmatpush1.bf16.msra.mxu0 0
        %1121 = vmatprep.subr.bf16.mxu0 0
        %1122 = vmatpush1.bf16.msra.mxu0 0
        %1123 = vmatprep.subr.bf16.mxu0 0
        %1124 = vmatpush1.bf16.msra.mxu0 0
        %1125 = vmatprep.subr.bf16.mxu0 0
        %1126 = vmatpush1.bf16.msra.mxu0 0
        %1127 = vmatprep.subr.bf16.mxu0 0
        %1128 = vmatpush1.bf16.msra.mxu0 0
        %1129 = vmatprep.subr.bf16.mxu0 0
        %1130 = vmatpush1.bf16.msra.mxu0 0
        %1131 = vmatprep.subr.bf16.mxu0 0
        %1132 = vmatpush1.bf16.msra.mxu0 0
        %1133 = vmatprep.mubr.bf16.mxu0 0
        %1134 = vmatmul.mubr.bf16.gmra.mrb[0].mxu0 %v1096
        %v1135 = vpop.f32.mrb[0].mxu0
        %v1136 = vadd.f32 0.0, %v1135
        %v1137 = vpop.f32.mrb[0].mxu0
        %v1138 = vpop.f32.mrb[0].mxu0
        %v1139 = vpop.f32.mrb[0].mxu0
        %1140 = vdwg.mxu0
        %1142 = vrot.lane.b32.xlu0 %v1136, 64
        %v1143 = vpop.permute.xlu0 %1142
        %v1145 = vsel %vm911, %v1021, %v1143
        %v1146 = vpack.c.bf16 %v1145, %v1145
        %v1147 = vld [vmem:[#allocation2] sm:$0xf]
        %v1148 = vld [vmem:[#allocation2 + $0x4] sm:$0xf]
        %v1149 = vld [vmem:[#allocation2 + $0x8] sm:$0xf]
        %v1150 = vld [vmem:[#allocation2 + $0xc] sm:$0xf]
        %v1151 = vld [vmem:[#allocation2 + $0x10] sm:$0xf]
        %v1152 = vld [vmem:[#allocation2 + $0x14] sm:$0xf]
        %v1153 = vld [vmem:[#allocation2 + $0x18] sm:$0xf]
        %v1154 = vld [vmem:[#allocation2 + $0x1c] sm:$0xf]
        %v1155 = vld [vmem:[#allocation2 + $0x20] sm:$0xf]
        %v1156 = vld [vmem:[#allocation2 + $0x24] sm:$0xf]
        %v1157 = vld [vmem:[#allocation2 + $0x28] sm:$0xf]
        %v1158 = vld [vmem:[#allocation2 + $0x2c] sm:$0xf]
        %v1159 = vld [vmem:[#allocation2 + $0x30] sm:$0xf]
        %v1160 = vld [vmem:[#allocation2 + $0x34] sm:$0xf]
        %v1161 = vld [vmem:[#allocation2 + $0x38] sm:$0xf]
        %v1162 = vld [vmem:[#allocation2 + $0x3c] sm:$0xf]
        %v1163 = vld [vmem:[#allocation5] sm:$0x1]
        %v1164 = vunpack.c.l.bf16 %v1163
        %v1165 = vlaneseq
        %v1166 = vshrl.u32 %v1165, 7
        %v1167 = vsub.s32 0, %v1166
        %v1168 = vrot.slane %v1164, %v1167
        %v1185 = vunpack.c.l.b16 %v1147
        %v1186 = vunpack.c.l.b16 %v1148
        %v1187 = vunpack.c.l.b16 %v1149
        %v1188 = vunpack.c.l.b16 %v1150
        %v1189 = vunpack.c.l.b16 %v1151
        %v1190 = vunpack.c.l.b16 %v1152
        %v1191 = vunpack.c.l.b16 %v1153
        %v1192 = vunpack.c.l.b16 %v1154
        %v1193 = vunpack.c.l.b16 %v1155
        %v1194 = vunpack.c.l.b16 %v1156
        %v1195 = vunpack.c.l.b16 %v1157
        %v1196 = vunpack.c.l.b16 %v1158
        %v1197 = vunpack.c.l.b16 %v1159
        %v1198 = vunpack.c.l.b16 %v1160
        %v1199 = vunpack.c.l.b16 %v1161
        %v1200 = vunpack.c.l.b16 %v1162
        %v1201 = vpack.c.b16 %v1186, %v1185
        %v1202 = vpack.c.b16 %v1188, %v1187
        %v1203 = vpack.c.b16 %v1190, %v1189
        %v1204 = vpack.c.b16 %v1192, %v1191
        %v1205 = vpack.c.b16 %v1194, %v1193
        %v1206 = vpack.c.b16 %v1196, %v1195
        %v1207 = vpack.c.b16 %v1198, %v1197
        %v1208 = vpack.c.b16 %v1200, %v1199
        %1217 = vmatprep.subr.bf16.mxu0 0
        %1218 = vmatpush1.bf16.msra.mxu0 %v1201
        %1219 = vmatprep.subr.bf16.mxu0 0
        %1220 = vmatpush1.bf16.msra.mxu0 %v1202
        %1221 = vmatprep.subr.bf16.mxu0 0
        %1222 = vmatpush1.bf16.msra.mxu0 %v1203
        %1223 = vmatprep.subr.bf16.mxu0 0
        %1224 = vmatpush1.bf16.msra.mxu0 %v1204
        %1225 = vmatprep.subr.bf16.mxu0 0
        %1226 = vmatpush1.bf16.msra.mxu0 %v1205
        %1227 = vmatprep.subr.bf16.mxu0 0
        %1228 = vmatpush1.bf16.msra.mxu0 %v1206
        %1229 = vmatprep.subr.bf16.mxu0 0
        %1230 = vmatpush1.bf16.msra.mxu0 %v1207
        %1231 = vmatprep.subr.bf16.mxu0 0
        %1232 = vmatpush1.bf16.msra.mxu0 %v1208
        %1233 = vmatprep.subr.bf16.mxu0 0
        %1234 = vmatpush1.bf16.msra.mxu0 0
        %1235 = vmatprep.subr.bf16.mxu0 0
        %1236 = vmatpush1.bf16.msra.mxu0 0
        %1237 = vmatprep.subr.bf16.mxu0 0
        %1238 = vmatpush1.bf16.msra.mxu0 0
        %1239 = vmatprep.subr.bf16.mxu0 0
        %1240 = vmatpush1.bf16.msra.mxu0 0
        %1241 = vmatprep.subr.bf16.mxu0 0
        %1242 = vmatpush1.bf16.msra.mxu0 0
        %1243 = vmatprep.subr.bf16.mxu0 0
        %1244 = vmatpush1.bf16.msra.mxu0 0
        %1245 = vmatprep.subr.bf16.mxu0 0
        %1246 = vmatpush1.bf16.msra.mxu0 0
        %1247 = vmatprep.subr.bf16.mxu0 0
        %1248 = vmatpush1.bf16.msra.mxu0 0
        %1249 = vmatprep.mubr.bf16.mxu0 0
        %1250 = vmatmul.mubr.bf16.gmra.mrb[0].mxu0 %v1146
        %v1251 = vpop.f32.mrb[0].mxu0
        %v1252 = vadd.f32 %v1168, %v1251
        %v1253 = vpop.f32.mrb[0].mxu0
        %v1254 = vpop.f32.mrb[0].mxu0
        %v1255 = vpop.f32.mrb[0].mxu0
        %1256 = vdwg.mxu0
        %v1257 = vunpack.c.l.bf16 %v633
        %v1258 = vadd.f32 %v1257, %v1252
        %v1259 = vld [vmem:[#allocation11] sm:$0x1]
        %v1260 = vunpack.c.l.bf16 %v1259
        %v1261 = vld [vmem:[#allocation13] sm:$0x1]
        %v1262 = vunpack.c.l.bf16 %v1261
        %1263 = vadd.xlane.f32.xlu0 %v1258
        %v1264 = vpop.xlane.xlu0 %1263
        %v1265 = vrcp.pop 128.0
        %v1266 = vmul.f32 %v1264, %v1265
        %v1267 = vsub.f32 %v1258, %v1266
        %v1268 = vmul.f32 %v1267, %v1267
        %1269 = vadd.xlane.f32.xlu0 %v1268
        %v1270 = vpop.xlane.xlu0 %1269
        %v1271 = vmul.f32 %v1270, %v1265
        %v1272 = vadd.f32 %v1271, 1e-12
        %v1273 = vrsqrt.pop %v1272
        %v1274 = vmul.f32 %v1267, %v1273
        %v1275 = vlaneseq
        %v1276 = vshrl.u32 %v1275, 7
        %v1277 = vsub.s32 0, %v1276
        %v1278 = vrot.slane %v1260, %v1277
        %v1279 = vmul.f32 %v1274, %v1278
        %v1280 = vlaneseq
        %v1281 = vshrl.u32 %v1280, 7
        %v1282 = vsub.s32 0, %v1281
        %v1283 = vrot.slane %v1262, %v1282
        %v1284 = vadd.f32 %v1279, %v1283
        %v1285 = vpack.c.bf16 %v1284, %v1284
        %v1286 = vld [vmem:[#allocation7] sm:$0xff]
        %v1287 = vld [vmem:[#allocation7 + $0x8] sm:$0xff]
        %v1288 = vld [vmem:[#allocation7 + $0x10] sm:$0xff]
        %v1289 = vld [vmem:[#allocation7 + $0x18] sm:$0xff]
        %v1290 = vld [vmem:[#allocation7 + $0x20] sm:$0xff]
        %v1291 = vld [vmem:[#allocation7 + $0x28] sm:$0xff]
        %v1292 = vld [vmem:[#allocation7 + $0x30] sm:$0xff]
        %v1293 = vld [vmem:[#allocation7 + $0x38] sm:$0xff]
        %v1294 = vld [vmem:[#allocation7 + $0x40] sm:$0xff]
        %v1295 = vld [vmem:[#allocation7 + $0x48] sm:$0xff]
        %v1296 = vld [vmem:[#allocation7 + $0x50] sm:$0xff]
        %v1297 = vld [vmem:[#allocation7 + $0x58] sm:$0xff]
        %v1298 = vld [vmem:[#allocation7 + $0x60] sm:$0xff]
        %v1299 = vld [vmem:[#allocation7 + $0x68] sm:$0xff]
        %v1300 = vld [vmem:[#allocation7 + $0x70] sm:$0xff]
        %v1301 = vld [vmem:[#allocation7 + $0x78] sm:$0xff]
        %v1302 = vld [vmem:[%s7] sm:$0x3]
        %v1303 = vunpack.c.l.bf16 %v1302
        %v1305 = vlaneseq
        %v1306 = vshrl.u32 %v1305, 7
        %v1307 = vsub.s32 0, %v1306
        %v1308 = vrot.slane %v1303, %v1307
        %v1309 = vlaneseq
        %v1310 = vshrl.u32 %v1309, 7
        %v1311 = vsub.s32 2, %v1310
        %v1312 = vrot.slane %v1303, %v1311
        %v1315 = vlaneseq
        %v1316 = vshrl.u32 %v1315, 7
        %v1317 = vsub.s32 0, %v1316
        %v1318 = vrot.slane %v1308, %v1317
        %v1319 = vlaneseq
        %v1320 = vshrl.u32 %v1319, 7
        %v1321 = vsub.s32 0, %v1320
        %v1322 = vrot.slane %v1312, %v1321
        %v1339 = vunpack.c.l.b16 %v1286
        %v1340 = vunpack.c.h.b16 %v1286
        %v1341 = vunpack.c.l.b16 %v1287
        %v1342 = vunpack.c.h.b16 %v1287
        %v1343 = vunpack.c.l.b16 %v1288
        %v1344 = vunpack.c.h.b16 %v1288
        %v1345 = vunpack.c.l.b16 %v1289
        %v1346 = vunpack.c.h.b16 %v1289
        %v1347 = vunpack.c.l.b16 %v1290
        %v1348 = vunpack.c.h.b16 %v1290
        %v1349 = vunpack.c.l.b16 %v1291
        %v1350 = vunpack.c.h.b16 %v1291
        %v1351 = vunpack.c.l.b16 %v1292
        %v1352 = vunpack.c.h.b16 %v1292
        %v1353 = vunpack.c.l.b16 %v1293
        %v1354 = vunpack.c.h.b16 %v1293
        %v1355 = vunpack.c.l.b16 %v1294
        %v1356 = vunpack.c.h.b16 %v1294
        %v1357 = vunpack.c.l.b16 %v1295
        %v1358 = vunpack.c.h.b16 %v1295
        %v1359 = vunpack.c.l.b16 %v1296
        %v1360 = vunpack.c.h.b16 %v1296
        %v1361 = vunpack.c.l.b16 %v1297
        %v1362 = vunpack.c.h.b16 %v1297
        %v1363 = vunpack.c.l.b16 %v1298
        %v1364 = vunpack.c.h.b16 %v1298
        %v1365 = vunpack.c.l.b16 %v1299
        %v1366 = vunpack.c.h.b16 %v1299
        %v1367 = vunpack.c.l.b16 %v1300
        %v1368 = vunpack.c.h.b16 %v1300
        %v1369 = vunpack.c.l.b16 %v1301
        %v1370 = vunpack.c.h.b16 %v1301
        %v1371 = vpack.c.b16 %v1341, %v1339
        %v1372 = vpack.c.b16 %v1342, %v1340
        %v1373 = vpack.c.b16 %v1345, %v1343
        %v1374 = vpack.c.b16 %v1346, %v1344
        %v1375 = vpack.c.b16 %v1349, %v1347
        %v1376 = vpack.c.b16 %v1350, %v1348
        %v1377 = vpack.c.b16 %v1353, %v1351
        %v1378 = vpack.c.b16 %v1354, %v1352
        %v1379 = vpack.c.b16 %v1357, %v1355
        %v1380 = vpack.c.b16 %v1358, %v1356
        %v1381 = vpack.c.b16 %v1361, %v1359
        %v1382 = vpack.c.b16 %v1362, %v1360
        %v1383 = vpack.c.b16 %v1365, %v1363
        %v1384 = vpack.c.b16 %v1366, %v1364
        %v1385 = vpack.c.b16 %v1369, %v1367
        %v1386 = vpack.c.b16 %v1370, %v1368
        %1403 = vmatprep.subr.bf16.mxu0 %v1372
        %1404 = vmatpush1.bf16.msra.mxu0 %v1371
        %1405 = vmatprep.subr.bf16.mxu0 %v1374
        %1406 = vmatpush1.bf16.msra.mxu0 %v1373
        %1407 = vmatprep.subr.bf16.mxu0 %v1376
        %1408 = vmatpush1.bf16.msra.mxu0 %v1375
        %1409 = vmatprep.subr.bf16.mxu0 %v1378
        %1410 = vmatpush1.bf16.msra.mxu0 %v1377
        %1411 = vmatprep.subr.bf16.mxu0 %v1380
        %1412 = vmatpush1.bf16.msra.mxu0 %v1379
        %1413 = vmatprep.subr.bf16.mxu0 %v1382
        %1414 = vmatpush1.bf16.msra.mxu0 %v1381
        %1415 = vmatprep.subr.bf16.mxu0 %v1384
        %1416 = vmatpush1.bf16.msra.mxu0 %v1383
        %1417 = vmatprep.subr.bf16.mxu0 %v1386
        %1418 = vmatpush1.bf16.msra.mxu0 %v1385
        %1419 = vmatprep.subr.bf16.mxu0 0
        %1420 = vmatpush1.bf16.msra.mxu0 0
        %1421 = vmatprep.subr.bf16.mxu0 0
        %1422 = vmatpush1.bf16.msra.mxu0 0
        %1423 = vmatprep.subr.bf16.mxu0 0
        %1424 = vmatpush1.bf16.msra.mxu0 0
        %1425 = vmatprep.subr.bf16.mxu0 0
        %1426 = vmatpush1.bf16.msra.mxu0 0
        %1427 = vmatprep.subr.bf16.mxu0 0
        %1428 = vmatpush1.bf16.msra.mxu0 0
        %1429 = vmatprep.subr.bf16.mxu0 0
        %1430 = vmatpush1.bf16.msra.mxu0 0
        %1431 = vmatprep.subr.bf16.mxu0 0
        %1432 = vmatpush1.bf16.msra.mxu0 0
        %1433 = vmatprep.subr.bf16.mxu0 0
        %1434 = vmatpush1.bf16.msra.mxu0 0
        %1435 = vmatprep.mubr.bf16.mxu0 0
        %1436 = vmatmul.mubr.bf16.gmra.mrb[0].mxu0 %v1285
        %v1437 = vpop.f32.mrb[0].mxu0
        %v1438 = vadd.f32 %v1318, %v1437
        %v1439 = vpop.f32.mrb[0].mxu0
        %v1440 = vadd.f32 %v1322, %v1439
        %v1441 = vpop.f32.mrb[0].mxu0
        %v1442 = vpop.f32.mrb[0].mxu0
        %1443 = vdwg.mxu0
        %v1444 = vmul.f32 %v1438, %v1438
        %v1445 = vmul.f32 %v1440, %v1440
        %v1446 = vmul.f32 %v1438, %v1444
        %v1447 = vmul.f32 %v1440, %v1445
        %v1448 = vmul.f32 %v1446, 0.044715
        %v1449 = vmul.f32 %v1447, 0.044715
        %v1450 = vadd.f32 %v1438, %v1448
        %v1451 = vadd.f32 %v1440, %v1449
        %v1452 = vmul.f32 %v1450, 0.7978846
        %v1453 = vmul.f32 %v1451, 0.7978846
        %v1454 = vtanh.pop %v1452
        %v1455 = vtanh.pop %v1453
        %v1456 = vadd.f32 %v1454, 1.0
        %v1457 = vadd.f32 %v1455, 1.0
        %v1458 = vmul.f32 %v1456, 0.5
        %v1459 = vmul.f32 %v1457, 0.5
        %v1460 = vmul.f32 %v1438, %v1458
        %v1461 = vmul.f32 %v1440, %v1459
        %v1462 = vpack.c.bf16 %v1460, %v1460
        %v1463 = vpack.c.bf16 %v1461, %v1461
        %v1464 = vld [vmem:[#allocation8] sm:$0xf]
        %v1465 = vld [vmem:[#allocation8 + $0x4] sm:$0xf]
        %v1466 = vld [vmem:[#allocation8 + $0x8] sm:$0xf]
        %v1467 = vld [vmem:[#allocation8 + $0xc] sm:$0xf]
        %v1468 = vld [vmem:[#allocation8 + $0x10] sm:$0xf]
        %v1469 = vld [vmem:[#allocation8 + $0x14] sm:$0xf]
        %v1470 = vld [vmem:[#allocation8 + $0x18] sm:$0xf]
        %v1471 = vld [vmem:[#allocation8 + $0x1c] sm:$0xf]
        %v1472 = vld [vmem:[#allocation8 + $0x20] sm:$0xf]
        %v1473 = vld [vmem:[#allocation8 + $0x24] sm:$0xf]
        %v1474 = vld [vmem:[#allocation8 + $0x28] sm:$0xf]
        %v1475 = vld [vmem:[#allocation8 + $0x2c] sm:$0xf]
        %v1476 = vld [vmem:[#allocation8 + $0x30] sm:$0xf]
        %v1477 = vld [vmem:[#allocation8 + $0x34] sm:$0xf]
        %v1478 = vld [vmem:[#allocation8 + $0x38] sm:$0xf]
        %v1479 = vld [vmem:[#allocation8 + $0x3c] sm:$0xf]
        %v1480 = vld [vmem:[#allocation8 + $0x40] sm:$0xf]
        %v1481 = vld [vmem:[#allocation8 + $0x44] sm:$0xf]
        %v1482 = vld [vmem:[#allocation8 + $0x48] sm:$0xf]
        %v1483 = vld [vmem:[#allocation8 + $0x4c] sm:$0xf]
        %v1484 = vld [vmem:[#allocation8 + $0x50] sm:$0xf]
        %v1485 = vld [vmem:[#allocation8 + $0x54] sm:$0xf]
        %v1486 = vld [vmem:[#allocation8 + $0x58] sm:$0xf]
        %v1487 = vld [vmem:[#allocation8 + $0x5c] sm:$0xf]
        %v1488 = vld [vmem:[#allocation8 + $0x60] sm:$0xf]
        %v1489 = vld [vmem:[#allocation8 + $0x64] sm:$0xf]
        %v1490 = vld [vmem:[#allocation8 + $0x68] sm:$0xf]
        %v1491 = vld [vmem:[#allocation8 + $0x6c] sm:$0xf]
        %v1492 = vld [vmem:[#allocation8 + $0x70] sm:$0xf]
        %v1493 = vld [vmem:[#allocation8 + $0x74] sm:$0xf]
        %v1494 = vld [vmem:[#allocation8 + $0x78] sm:$0xf]
        %v1495 = vld [vmem:[#allocation8 + $0x7c] sm:$0xf]
        %v1496 = vld [vmem:[#allocation10] sm:$0x1]
        %v1497 = vunpack.c.l.bf16 %v1496
        %v1498 = vlaneseq
        %v1499 = vshrl.u32 %v1498, 7
        %v1500 = vsub.s32 0, %v1499
        %v1501 = vrot.slane %v1497, %v1500
        %v1534 = vunpack.c.l.b16 %v1464
        %v1535 = vunpack.c.l.b16 %v1465
        %v1536 = vunpack.c.l.b16 %v1466
        %v1537 = vunpack.c.l.b16 %v1467
        %v1538 = vunpack.c.l.b16 %v1468
        %v1539 = vunpack.c.l.b16 %v1469
        %v1540 = vunpack.c.l.b16 %v1470
        %v1541 = vunpack.c.l.b16 %v1471
        %v1542 = vunpack.c.l.b16 %v1472
        %v1543 = vunpack.c.l.b16 %v1473
        %v1544 = vunpack.c.l.b16 %v1474
        %v1545 = vunpack.c.l.b16 %v1475
        %v1546 = vunpack.c.l.b16 %v1476
        %v1547 = vunpack.c.l.b16 %v1477
        %v1548 = vunpack.c.l.b16 %v1478
        %v1549 = vunpack.c.l.b16 %v1479
        %v1550 = vunpack.c.l.b16 %v1480
        %v1551 = vunpack.c.l.b16 %v1481
        %v1552 = vunpack.c.l.b16 %v1482
        %v1553 = vunpack.c.l.b16 %v1483
        %v1554 = vunpack.c.l.b16 %v1484
        %v1555 = vunpack.c.l.b16 %v1485
        %v1556 = vunpack.c.l.b16 %v1486
        %v1557 = vunpack.c.l.b16 %v1487
        %v1558 = vunpack.c.l.b16 %v1488
        %v1559 = vunpack.c.l.b16 %v1489
        %v1560 = vunpack.c.l.b16 %v1490
        %v1561 = vunpack.c.l.b16 %v1491
        %v1562 = vunpack.c.l.b16 %v1492
        %v1563 = vunpack.c.l.b16 %v1493
        %v1564 = vunpack.c.l.b16 %v1494
        %v1565 = vunpack.c.l.b16 %v1495
        %v1566 = vpack.c.b16 %v1535, %v1534
        %v1567 = vpack.c.b16 %v1537, %v1536
        %v1568 = vpack.c.b16 %v1539, %v1538
        %v1569 = vpack.c.b16 %v1541, %v1540
        %v1570 = vpack.c.b16 %v1543, %v1542
        %v1571 = vpack.c.b16 %v1545, %v1544
        %v1572 = vpack.c.b16 %v1547, %v1546
        %v1573 = vpack.c.b16 %v1549, %v1548
        %v1574 = vpack.c.b16 %v1551, %v1550
        %v1575 = vpack.c.b16 %v1553, %v1552
        %v1576 = vpack.c.b16 %v1555, %v1554
        %v1577 = vpack.c.b16 %v1557, %v1556
        %v1578 = vpack.c.b16 %v1559, %v1558
        %v1579 = vpack.c.b16 %v1561, %v1560
        %v1580 = vpack.c.b16 %v1563, %v1562
        %v1581 = vpack.c.b16 %v1565, %v1564
        %1598 = vmatprep.subr.bf16.mxu0 0
        %1599 = vmatpush1.bf16.msra.mxu0 %v1566
        %1600 = vmatprep.subr.bf16.mxu0 0
        %1601 = vmatpush1.bf16.msra.mxu0 %v1567
        %1602 = vmatprep.subr.bf16.mxu0 0
        %1603 = vmatpush1.bf16.msra.mxu0 %v1568
        %1604 = vmatprep.subr.bf16.mxu0 0
        %1605 = vmatpush1.bf16.msra.mxu0 %v1569
        %1606 = vmatprep.subr.bf16.mxu0 0
        %1607 = vmatpush1.bf16.msra.mxu0 %v1570
        %1608 = vmatprep.subr.bf16.mxu0 0
        %1609 = vmatpush1.bf16.msra.mxu0 %v1571
        %1610 = vmatprep.subr.bf16.mxu0 0
        %1611 = vmatpush1.bf16.msra.mxu0 %v1572
        %1612 = vmatprep.subr.bf16.mxu0 0
        %1613 = vmatpush1.bf16.msra.mxu0 %v1573
        %1614 = vmatprep.subr.bf16.mxu0 0
        %1615 = vmatpush1.bf16.msra.mxu0 %v1574
        %1616 = vmatprep.subr.bf16.mxu0 0
        %1617 = vmatpush1.bf16.msra.mxu0 %v1575
        %1618 = vmatprep.subr.bf16.mxu0 0
        %1619 = vmatpush1.bf16.msra.mxu0 %v1576
        %1620 = vmatprep.subr.bf16.mxu0 0
        %1621 = vmatpush1.bf16.msra.mxu0 %v1577
        %1622 = vmatprep.subr.bf16.mxu0 0
        %1623 = vmatpush1.bf16.msra.mxu0 %v1578
        %1624 = vmatprep.subr.bf16.mxu0 0
        %1625 = vmatpush1.bf16.msra.mxu0 %v1579
        %1626 = vmatprep.subr.bf16.mxu0 0
        %1627 = vmatpush1.bf16.msra.mxu0 %v1580
        %1628 = vmatprep.subr.bf16.mxu0 0
        %1629 = vmatpush1.bf16.msra.mxu0 %v1581
        %1630 = vmatprep.mubr.bf16.mxu0 %v1463
        %1631 = vmatmul.mubr.bf16.gmra.mrb[0].mxu0 %v1462
        %v1632 = vpop.f32.mrb[0].mxu0
        %v1633 = vadd.f32 %v1501, %v1632
        %v1634 = vpop.f32.mrb[0].mxu0
        %v1635 = vpop.f32.mrb[0].mxu0
        %v1636 = vpop.f32.mrb[0].mxu0
        %1637 = vdwg.mxu0
        %v1638 = vadd.f32 %v1284, %v1633
        %v1639 = vld [vmem:[#allocation14] sm:$0x1]
        %v1640 = vunpack.c.l.bf16 %v1639
        %v1641 = vld [vmem:[#allocation16] sm:$0x1]
        %v1642 = vunpack.c.l.bf16 %v1641
        %1643 = vadd.xlane.f32.xlu0 %v1638
        %v1644 = vpop.xlane.xlu0 %1643
        %v1645 = vmul.f32 %v1644, %v1265
        %v1646 = vsub.f32 %v1638, %v1645
        %v1647 = vmul.f32 %v1646, %v1646
        %1648 = vadd.xlane.f32.xlu0 %v1647
        %v1649 = vpop.xlane.xlu0 %1648
        %v1650 = vmul.f32 %v1649, %v1265
        %v1651 = vadd.f32 %v1650, 1e-12
        %v1652 = vrsqrt.pop %v1651
        %v1653 = vmul.f32 %v1646, %v1652
        %v1654 = vlaneseq
        %v1655 = vshrl.u32 %v1654, 7
        %v1656 = vsub.s32 0, %v1655
        %v1657 = vrot.slane %v1640, %v1656
        %v1658 = vmul.f32 %v1653, %v1657
        %v1659 = vlaneseq
        %v1660 = vshrl.u32 %v1659, 7
        %v1661 = vsub.s32 0, %v1660
        %v1662 = vrot.slane %v1642, %v1661
        %v1663 = vadd.f32 %v1658, %v1662
        %v1664 = vpack.c.bf16 %v1663, %v1663
        %1665 = vst [vmem:[%s616] sm:$0xf] %v1664
        %v1666 = vpack.c.bf16 %v634, %v634
        %v1668 = vsel %vm966, %v1666, 0
        %v1671 = vsel %vm982, %v1664, 0
        %1673 = vmatprep.subr.bf16.mxu0 0
        %1674 = vmatpush1.bf16.msra.mxu0 %v1671
        %1675 = vmatprep.subr.bf16.mxu0 0
        %1676 = vmatpush1.bf16.msra.mxu0 0
        %1677 = vmatprep.subr.bf16.mxu0 0
        %1678 = vmatpush1.bf16.msra.mxu0 0
        %1679 = vmatprep.subr.bf16.mxu0 0
        %1680 = vmatpush1.bf16.msra.mxu0 0
        %1681 = vmatprep.subr.bf16.mxu0 0
        %1682 = vmatpush1.bf16.msra.mxu0 0
        %1683 = vmatprep.subr.bf16.mxu0 0
        %1684 = vmatpush1.bf16.msra.mxu0 0
        %1685 = vmatprep.subr.bf16.mxu0 0
        %1686 = vmatpush1.bf16.msra.mxu0 0
        %1687 = vmatprep.subr.bf16.mxu0 0
        %1688 = vmatpush1.bf16.msra.mxu0 0
        %1689 = vmatprep.subr.bf16.mxu0 0
        %1690 = vmatpush1.bf16.msra.mxu0 0
        %1691 = vmatprep.subr.bf16.mxu0 0
        %1692 = vmatpush1.bf16.msra.mxu0 0
        %1693 = vmatprep.subr.bf16.mxu0 0
        %1694 = vmatpush1.bf16.msra.mxu0 0
        %1695 = vmatprep.subr.bf16.mxu0 0
        %1696 = vmatpush1.bf16.msra.mxu0 0
        %1697 = vmatprep.subr.bf16.mxu0 0
        %1698 = vmatpush1.bf16.msra.mxu0 0
        %1699 = vmatprep.subr.bf16.mxu0 0
        %1700 = vmatpush1.bf16.msra.mxu0 0
        %1701 = vmatprep.subr.bf16.mxu0 0
        %1702 = vmatpush1.bf16.msra.mxu0 0
        %1703 = vmatprep.subr.bf16.mxu0 0
        %1704 = vmatpush1.bf16.msra.mxu0 0
        %1705 = vmatprep.mubr.bf16.mxu0 0
        %1706 = vmatmul.mubr.bf16.gmra.mrb[0].mxu0 %v1668
        %v1707 = vpop.f32.mrb[0].mxu0
        %v1708 = vadd.f32 0.0, %v1707
        %v1709 = vpop.f32.mrb[0].mxu0
        %v1710 = vpop.f32.mrb[0].mxu0
        %v1711 = vpop.f32.mrb[0].mxu0
        %1712 = vdwg.mxu0
        %vm1713 = vcmask 57344
        %v1714 = vsel %vm1713, %v634, 0.0
        %1715 = vadd.xlane.f32.xlu0 %v1714
        %v1716 = vpop.xlane.xlu0 %1715
        %v1717 = vrcp.pop %v1716
        %v1718 = vmul.f32 %v1708, %v1717
        %v1719 = vpack.c.bf16 %v1718, %v1718
        %vm1720 = vcmask 1040384
        %vm1721 = vsmask.f32 256
        %vm1722 = vmand %vm1720, %vm1721
        %v1723 = vld [vmem:[%s631] sm:$0x1]
        %v1724 = vsel %vm1722, %v1719, %v1723
        %1725 = vst [vmem:[%s631] sm:$0x1] %v1724
        %s1726 = sand.u32 %s347, 1
        %s1727 = scalar_lea.sflag [#allocation4], %s1726
        %s1728 = sand.u32 %s347, 1
        %s1729 = smul.addr %s1728, 4
        %s1730 = scalar_lea.vmem [#allocation17], %s1729
        %p1731 = scmp.lt.s32.totalorder %s35, 1
        %s1732 = scalar_select %p1731, %s35, 1
        %s1733 = scalar_lea.vmem %s15, %s1732
        // Predicated region
        $region113: #{encoder_forward.1} parent=75 // pred_check
          %p1734 = pneg %p357
        $region114: #{encoder_forward.1} parent=75 // pred_check_branch
          %1736 = sbr.rel (%p1734) target = $region116
        $region115: #{encoder_forward.1} parent=75 // pred_region
          %s1738 = ssub.s32 64, 64
          %1739 = vsyncadd %s1727, %s1738
          %s1740 = smul.addr %s35, 64
          %s1741 = scalar_lea.hbm %s14, %s1740
          %s1743 = sshll.u32 %s1730, 4
          %s1744 = int_to_ptr.vmem [resolvable:$true] %s1743
          %1746 = dma.vmem_to_hbm [thread:$0]  %s1744, 64, %s1741, %s1727
        $region116: #{encoder_forward.1} parent=75 // pred_fallthru
          _
        // Predicated region
        $region117: #{encoder_forward.1} parent=75 // pred_check
          %p1747 = pneg %p383
        $region118: #{encoder_forward.1} parent=75 // pred_check_branch
          %1749 = sbr.rel (%p1747) target = $region120
        $region119: #{encoder_forward.1} parent=75 // pred_region
          _
        $region120: #{encoder_forward.1} parent=75 // pred_fallthru
          _
      $region76: #{encoder_forward.1} parent=5 // pred_fallthru
        _
      %p1750 = scmp.le.s32.totalorder 2, %s30
      // Predicated region
      $region121: #{encoder_forward.1} parent=5 // pred_check
        %p1751 = pneg %p1750
      $region122: #{encoder_forward.1} parent=5 // pred_check_branch
        %1753 = sbr.rel (%p1751) target = $region124
      $region123: #{encoder_forward.1} parent=5 // pred_region
        %s1754 = ssub.s32 %s30, 2
        // Predicated region
        $region125: #{encoder_forward.1} parent=123 // pred_check
          %p1755 = pneg %p363
        $region126: #{encoder_forward.1} parent=123 // pred_check_branch
          %1757 = sbr.rel (%p1755) target = $region128
        $region127: #{encoder_forward.1} parent=123 // pred_region
          %s1758 = sand.u32 %s348, 1
          %s1759 = scalar_lea.sflag [#allocation4], %s1758
          %s1760 = sand.u32 %s348, 1
          %s1761 = smul.addr %s1760, 4
          %s1762 = scalar_lea.vmem [#allocation17], %s1761
          %1763 = dma.done %s1759, 64
        $region128: #{encoder_forward.1} parent=123 // pred_fallthru
          _
        // Predicated region
        $region129: #{encoder_forward.1} parent=123 // pred_check
          %p1764 = pneg %p389
        $region130: #{encoder_forward.1} parent=123 // pred_check_branch
          %1766 = sbr.rel (%p1764) target = $region132
        $region131: #{encoder_forward.1} parent=123 // pred_region
          %p1767 = scmp.lt.s32.totalorder %s36, 1
          %s1768 = scalar_select %p1767, %s36, 1
          %s1769 = scalar_lea.vmem %s15, %s1768
        $region132: #{encoder_forward.1} parent=123 // pred_fallthru
          _
      $region124: #{encoder_forward.1} parent=5 // pred_fallthru
        _
    $region6: #{encoder_forward.1} parent=1 // loop_footer
      %s34 = sadd.s32 1, %s30
    $region7: #{encoder_forward.1} parent=1 // loop_footer_branch
      %29 = sbr.rel target = $region3
    $region8: #{encoder_forward.1} parent=1 // loop_exit
      _
    %1770 = vsyncpa [#allocation3], 1
    %s1771 = scalar_lea.sflag [#allocation3], 1
    %1772 = vsyncpa %s1771, 1
    %1773 = vsyncpa [#allocation6], 1
    %1774 = vsyncpa [#allocation9], 1
    %1775 = vsyncpa [#allocation12], 1
    %1776 = vsyncpa [#allocation15], 1
    %1777 = vsyncpa [#allocation4], 1
    %s1778 = scalar_lea.sflag [#allocation4], 1
    %1779 = vsyncpa %s1778, 1

</llo_original>
